<compile_context>
chip_gen: v6e
topology: v6e:2x2x1
jax: 0.10.0
libtpu: 0.0.40
codegen_flags: <defaults>
</compile_context>

<pallas_src>
import functools

import jax
import jax.numpy as jnp
from jax.experimental import pallas as pl
from jax.experimental.pallas import tpu as pltpu


def _round_up(x, m):
    return (x + m - 1) // m * m


# ----------------------------------------------------------------------------
# Fused Pallas kernel: the entire SkipLSTM stack in one launch
# ----------------------------------------------------------------------------
def _skip_lstm_stack_kernel(x_ref, h0_ref, c0_ref, wih_ref, whh_ref, b_ref,
                            h_out_ref, c_out_ref, *, num_layers):
    x = x_ref[...]                       # (TB, H) f32 — residual for layer 0
    h_in = x
    c_new = None

    # Small static layer count -> unrolled Python loop; weights for all layers
    # are resident in VMEM across the whole batch grid.
    # TODO(synk): for deep stacks (L > ~4) switch to lax.fori_loop (and
    # per-layer weight DMA) to bound vreg live ranges / VMEM.
    for layer in range(num_layers):
        h_prev = h0_ref[layer]           # (TB, H) f32
        c_prev = c0_ref[layer]           # (TB, H) f32

        xin_bf = h_in.astype(jnp.bfloat16)
        hin_bf = h_prev.astype(jnp.bfloat16)

        # Per-gate weight slabs -> each pre-activation lands at lane offset 0
        # (no sub-128-lane slicing of a (TB, 4H) result, no lane concat).
        pre = []
        for g in range(4):               # PyTorch gate order [i, f, g, o]
            pre.append(
                jnp.dot(xin_bf, wih_ref[layer, g],
                        preferred_element_type=jnp.float32)
                + jnp.dot(hin_bf, whh_ref[layer, g],
                          preferred_element_type=jnp.float32)
                + b_ref[layer, g]        # (1, H) f32, broadcast
            )

        i_g = jax.nn.sigmoid(pre[0])
        f_g = jax.nn.sigmoid(pre[1])
        g_g = jnp.tanh(pre[2])
        o_g = jax.nn.sigmoid(pre[3])

        c_new = f_g * c_prev + i_g * g_g
        h_new = o_g * jnp.tanh(c_new)

        if layer == 0:
            # SkipLSTM residual branch (input_size == hidden_size).
            # TODO(synk): F.dropout on h before the residual add is identity
            # here (eval mode / p == 0.0).
            h_new = h_new + x

        h_in = h_new

    # Two lane-dense (TB, H) outputs — no (TB, 2H) concat copy.
    h_out_ref[...] = h_in
    c_out_ref[...] = c_new


def skip_lstm_forward(x, prev_states, params, dropout_p=0.0, training=False):
    """Reproduces SkipLSTM.forward: returns (h_last, c_last) of the top layer."""
    w_ih = params["w_ih"]                # (L, 4, H, H) bf16
    w_hh = params["w_hh"]                # (L, 4, H, H) bf16
    b = params["b"]                      # (L, 4, 1, H) f32
    L, _, H, _ = w_ih.shape
    B = x.shape[0]

    if L < 1:
        raise ValueError("num_layers must be >= 1")
    if x.shape[1] != H:
        # TODO(synk): the PyTorch mismatch branch indexes a 2-D tensor with 3
        # indices (residual[:, :, :H]) and would raise; we require
        # input_size == hidden_size, matching the working `h + residual` path.
        raise ValueError("SkipLSTM kernel requires input_size == hidden_size")

    # TODO(synk): stateful torch-RNG dropout is not reproduced (identity here).
    del dropout_p, training

    x = x.astype(jnp.float32)
    h0 = jnp.stack([s[0] for s in prev_states], axis=0).astype(jnp.float32)
    c0 = jnp.stack([s[1] for s in prev_states], axis=0).astype(jnp.float32)

    # Batch tile: fill the MXU M dimension (<= 256), sublane multiple of 8.
    TB = 256 if B >= 256 else _round_up(B, 8)
    B_pad = _round_up(B, TB)
    if B_pad != B:
        pad = B_pad - B
        x = jnp.pad(x, ((0, pad), (0, 0)))
        h0 = jnp.pad(h0, ((0, 0), (0, pad), (0, 0)))
        c0 = jnp.pad(c0, ((0, 0), (0, pad), (0, 0)))

    # VMEM budget: resident bf16 weights + double-buffered streamed blocks.
    weight_bytes = (w_ih.size + w_hh.size) * 2 + b.size * 4
    stream_bytes = (TB * H + 2 * L * TB * H + 2 * TB * H) * 4
    need = 2 * weight_bytes + 2 * stream_bytes + (4 << 20)
    vmem_limit = int(min(max(need, 32 << 20), 64 << 20))
    # TODO(synk): for very large H on v7x (64 MiB VMEM) switch to per-layer
    # weight double-buffering (memory_space=pl.ANY + pltpu.make_async_copy)
    # instead of keeping the whole (L, 4, H, H) stacks resident.
    # TODO(synk): this module is a single time step; if driven by an outer
    # scan, move the time loop into the kernel so weights are not re-streamed
    # from HBM every step.

    kernel = functools.partial(_skip_lstm_stack_kernel, num_layers=L)
    h_out, c_out = pl.pallas_call(
        kernel,
        grid=(B_pad // TB,),
        in_specs=[
            pl.BlockSpec((TB, H), lambda i: (i, 0)),             # x (streamed)
            pl.BlockSpec((L, TB, H), lambda i: (0, i, 0)),       # h0 (streamed)
            pl.BlockSpec((L, TB, H), lambda i: (0, i, 0)),       # c0 (streamed)
            pl.BlockSpec((L, 4, H, H), lambda i: (0, 0, 0, 0)),  # W_ih (resident)
            pl.BlockSpec((L, 4, H, H), lambda i: (0, 0, 0, 0)),  # W_hh (resident)
            pl.BlockSpec((L, 4, 1, H), lambda i: (0, 0, 0, 0)),  # bias (resident)
        ],
        out_specs=[
            pl.BlockSpec((TB, H), lambda i: (i, 0)),             # h_last
            pl.BlockSpec((TB, H), lambda i: (i, 0)),             # c_last
        ],
        out_shape=[
            jax.ShapeDtypeStruct((B_pad, H), jnp.float32),
            jax.ShapeDtypeStruct((B_pad, H), jnp.float32),
        ],
        compiler_params=pltpu.CompilerParams(
            dimension_semantics=("parallel",),
            vmem_limit_bytes=vmem_limit,
        ),
    )(x, h0, c0, w_ih, w_hh, b)

    return h_out[:B], c_out[:B]


# ----------------------------------------------------------------------------
# Parameter init (nn.LSTMCell-style uniform(-k, k)); per-gate bf16 slabs
# ----------------------------------------------------------------------------
def init_skip_lstm_params(key, input_size, hidden_size, num_layers, bias=True):
    if input_size != hidden_size:
        raise ValueError("SkipLSTM kernel requires input_size == hidden_size")
    H = hidden_size
    k = 1.0 / float(H) ** 0.5
    wih_l, whh_l, b_l = [], [], []
    for _ in range(num_layers):
        key, k1, k2, k3, k4 = jax.random.split(key, 5)
        w_ih = jax.random.uniform(k1, (4 * H, H), jnp.float32, -k, k)
        w_hh = jax.random.uniform(k2, (4 * H, H), jnp.float32, -k, k)
        if bias:
            b_ih = jax.random.uniform(k3, (4 * H,), jnp.float32, -k, k)
            b_hh = jax.random.uniform(k4, (4 * H,), jnp.float32, -k, k)
        else:
            b_ih = jnp.zeros((4 * H,), jnp.float32)
            b_hh = jnp.zeros((4 * H,), jnp.float32)
        # Per-gate slabs in PyTorch order [i, f, g, o], transposed for x @ W.
        wih_l.append(jnp.stack([w_ih[g * H:(g + 1) * H, :].T for g in range(4)], 0))
        whh_l.append(jnp.stack([w_hh[g * H:(g + 1) * H, :].T for g in range(4)], 0))
        b_l.append(jnp.stack(
            [(b_ih[g * H:(g + 1) * H] + b_hh[g * H:(g + 1) * H]).reshape(1, H)
             for g in range(4)], 0))
    return {
        "w_ih": jnp.stack(wih_l, 0).astype(jnp.bfloat16),  # (L, 4, H, H)
        "w_hh": jnp.stack(whh_l, 0).astype(jnp.bfloat16),  # (L, 4, H, H)
        "b": jnp.stack(b_l, 0),                            # (L, 4, 1, H) f32
    }


# ----------------------------------------------------------------------------
# Pure-JAX reference for validation (mirrors the kernel's bf16 rounding)
# ----------------------------------------------------------------------------
def _ref_lstm_cell(x, h, c, wih_l, whh_l, b_l):
    hp = jax.lax.Precision.HIGHEST
    xb = x.astype(jnp.bfloat16).astype(jnp.float32)
    hb = h.astype(jnp.bfloat16).astype(jnp.float32)
    pre = []
    for g in range(4):
        pre.append(jnp.dot(xb, wih_l[g].astype(jnp.float32), precision=hp)
                   + jnp.dot(hb, whh_l[g].astype(jnp.float32), precision=hp)
                   + b_l[g])
    i_g = jax.nn.sigmoid(pre[0])
    f_g = jax.nn.sigmoid(pre[1])
    g_g = jnp.tanh(pre[2])
    o_g = jax.nn.sigmoid(pre[3])
    c_new = f_g * c + i_g * g_g
    h_new = o_g * jnp.tanh(c_new)
    return h_new, c_new


def _ref_forward(x, prev_states, params):
    w_ih, w_hh, b = params["w_ih"], params["w_hh"], params["b"]
    L = w_ih.shape[0]
    residual = x
    h, c = _ref_lstm_cell(x, prev_states[0][0], prev_states[0][1],
                          w_ih[0], w_hh[0], b[0])
    h = h + residual
    for i in range(1, L):
        h, c = _ref_lstm_cell(h, prev_states[i][0], prev_states[i][1],
                              w_ih[i], w_hh[i], b[i])
    return h, c


if __name__ == "__main__":
    batch = 8
    input_size = 32
    hidden_size = 32
    num_layers = 2

    key = jax.random.PRNGKey(0)
    key, kx, *ks = jax.random.split(key, 2 + 2 * num_layers)

    x = jax.random.normal(kx, (batch, input_size), jnp.float32)
    prev_states = []
    for layer in range(num_layers):
        h0 = jax.random.normal(ks[2 * layer], (batch, hidden_size), jnp.float32)
        c0 = jax.random.normal(ks[2 * layer + 1], (batch, hidden_size),
                               jnp.float32)
        prev_states.append((h0, c0))

    params = init_skip_lstm_params(jax.random.PRNGKey(42), input_size,
                                   hidden_size, num_layers, bias=True)

    fwd = jax.jit(skip_lstm_forward)
    h_out, c_out = fwd(x, prev_states, params)
    jax.block_until_ready((h_out, c_out))

    h_ref, c_ref = _ref_forward(x, prev_states, params)
    assert h_out.shape == (batch, hidden_size)
    assert c_out.shape == (batch, hidden_size)
    assert jnp.allclose(h_out, h_ref, atol=5e-3, rtol=5e-3)
    assert jnp.allclose(c_out, c_ref, atol=5e-3, rtol=5e-3)

    print("KERNEL_OK")
</pallas_src>

<mosaic_0001>
module attributes {stable_mosaic.version = 11 : i64} {
  func.func @_skip_lstm_stack_kernel(%arg0: i32, %arg1: memref<8x32xf32, #tpu.memory_space<vmem>>, %arg2: memref<2x8x32xf32, #tpu.memory_space<vmem>>, %arg3: memref<2x8x32xf32, #tpu.memory_space<vmem>>, %arg4: memref<2x4x32x32xbf16, #tpu.memory_space<vmem>>, %arg5: memref<2x4x32x32xbf16, #tpu.memory_space<vmem>>, %arg6: memref<2x4x1x32xf32, #tpu.memory_space<vmem>>, %arg7: memref<8x32xf32, #tpu.memory_space<vmem>>, %arg8: memref<8x32xf32, #tpu.memory_space<vmem>>) attributes {dimension_semantics = [#tpu.dimension_semantics<parallel>], iteration_bounds = array<i64: 1>, scalar_prefetch = 0 : i64, scratch_operands = 0 : i64, tpu.core_type = #tpu.core_type<tc>, window_params = [{transform_indices = @transform_0, window_bounds = array<i64: 8, 32>}, {transform_indices = @transform_1, window_bounds = array<i64: 2, 8, 32>}, {transform_indices = @transform_2, window_bounds = array<i64: 2, 8, 32>}, {pipeline_mode = #tpu.pipeline_mode<synchronous>, transform_indices = @transform_3, window_bounds = array<i64: 2, 4, 32, 32>}, {pipeline_mode = #tpu.pipeline_mode<synchronous>, transform_indices = @transform_4, window_bounds = array<i64: 2, 4, 32, 32>}, {pipeline_mode = #tpu.pipeline_mode<synchronous>, transform_indices = @transform_5, window_bounds = array<i64: 2, 4, 1, 32>}, {transform_indices = @transform_6, window_bounds = array<i64: 8, 32>}, {transform_indices = @transform_7, window_bounds = array<i64: 8, 32>}]} {
    %c0 = arith.constant 0 : index
    %c0_0 = arith.constant 0 : index
    %0 = vector.load %arg1[%c0, %c0_0] : memref<8x32xf32, #tpu.memory_space<vmem>>, vector<8x32xf32>
    %c0_1 = arith.constant 0 : index
    %c0_2 = arith.constant 0 : index
    %c0_3 = arith.constant 0 : index
    %1 = vector.load %arg2[%c0_1, %c0_2, %c0_3] : memref<2x8x32xf32, #tpu.memory_space<vmem>>, vector<1x8x32xf32>
    %2 = vector.shape_cast %1 : vector<1x8x32xf32> to vector<8x32xf32>
    %c0_4 = arith.constant 0 : index
    %c0_5 = arith.constant 0 : index
    %c0_6 = arith.constant 0 : index
    %3 = vector.load %arg3[%c0_4, %c0_5, %c0_6] : memref<2x8x32xf32, #tpu.memory_space<vmem>>, vector<1x8x32xf32>
    %4 = vector.shape_cast %3 : vector<1x8x32xf32> to vector<8x32xf32>
    %5 = arith.truncf %0 : vector<8x32xf32> to vector<8x32xbf16>
    %6 = arith.truncf %2 : vector<8x32xf32> to vector<8x32xbf16>
    %c0_7 = arith.constant 0 : index
    %c0_8 = arith.constant 0 : index
    %c0_9 = arith.constant 0 : index
    %c0_10 = arith.constant 0 : index
    %7 = vector.load %arg4[%c0_7, %c0_8, %c0_9, %c0_10] : memref<2x4x32x32xbf16, #tpu.memory_space<vmem>>, vector<1x1x32x32xbf16>
    %8 = vector.shape_cast %7 : vector<1x1x32x32xbf16> to vector<32x32xbf16>
    %cst = arith.constant dense<0.000000e+00> : vector<8x32xf32>
    %9 = tpu.matmul %5, %8, %cst {dimension_numbers = #tpu.dot_dimension_numbers<[1], [0], [0], [1], [0, 0, 1, 1], [], []>} : vector<8x32xbf16>, vector<32x32xbf16>, vector<8x32xf32> -> vector<8x32xf32>
    %c0_11 = arith.constant 0 : index
    %c0_12 = arith.constant 0 : index
    %c0_13 = arith.constant 0 : index
    %c0_14 = arith.constant 0 : index
    %10 = vector.load %arg5[%c0_11, %c0_12, %c0_13, %c0_14] : memref<2x4x32x32xbf16, #tpu.memory_space<vmem>>, vector<1x1x32x32xbf16>
    %11 = vector.shape_cast %10 : vector<1x1x32x32xbf16> to vector<32x32xbf16>
    %cst_15 = arith.constant dense<0.000000e+00> : vector<8x32xf32>
    %12 = tpu.matmul %6, %11, %cst_15 {dimension_numbers = #tpu.dot_dimension_numbers<[1], [0], [0], [1], [0, 0, 1, 1], [], []>} : vector<8x32xbf16>, vector<32x32xbf16>, vector<8x32xf32> -> vector<8x32xf32>
    %13 = arith.addf %9, %12 : vector<8x32xf32>
    %c0_16 = arith.constant 0 : index
    %c0_17 = arith.constant 0 : index
    %c0_18 = arith.constant 0 : index
    %c0_19 = arith.constant 0 : index
    %14 = vector.load %arg6[%c0_16, %c0_17, %c0_18, %c0_19] : memref<2x4x1x32xf32, #tpu.memory_space<vmem>>, vector<1x1x1x32xf32>
    %15 = vector.shape_cast %14 : vector<1x1x1x32xf32> to vector<1x32xf32>
    %16 = vector.broadcast %15 : vector<1x32xf32> to vector<8x32xf32>
    %17 = arith.addf %13, %16 : vector<8x32xf32>
    %c0_20 = arith.constant 0 : index
    %c1 = arith.constant 1 : index
    %c0_21 = arith.constant 0 : index
    %c0_22 = arith.constant 0 : index
    %18 = vector.load %arg4[%c0_20, %c1, %c0_21, %c0_22] : memref<2x4x32x32xbf16, #tpu.memory_space<vmem>>, vector<1x1x32x32xbf16>
    %19 = vector.shape_cast %18 : vector<1x1x32x32xbf16> to vector<32x32xbf16>
    %cst_23 = arith.constant dense<0.000000e+00> : vector<8x32xf32>
    %20 = tpu.matmul %5, %19, %cst_23 {dimension_numbers = #tpu.dot_dimension_numbers<[1], [0], [0], [1], [0, 0, 1, 1], [], []>} : vector<8x32xbf16>, vector<32x32xbf16>, vector<8x32xf32> -> vector<8x32xf32>
    %c0_24 = arith.constant 0 : index
    %c1_25 = arith.constant 1 : index
    %c0_26 = arith.constant 0 : index
    %c0_27 = arith.constant 0 : index
    %21 = vector.load %arg5[%c0_24, %c1_25, %c0_26, %c0_27] : memref<2x4x32x32xbf16, #tpu.memory_space<vmem>>, vector<1x1x32x32xbf16>
    %22 = vector.shape_cast %21 : vector<1x1x32x32xbf16> to vector<32x32xbf16>
    %cst_28 = arith.constant dense<0.000000e+00> : vector<8x32xf32>
    %23 = tpu.matmul %6, %22, %cst_28 {dimension_numbers = #tpu.dot_dimension_numbers<[1], [0], [0], [1], [0, 0, 1, 1], [], []>} : vector<8x32xbf16>, vector<32x32xbf16>, vector<8x32xf32> -> vector<8x32xf32>
    %24 = arith.addf %20, %23 : vector<8x32xf32>
    %c0_29 = arith.constant 0 : index
    %c1_30 = arith.constant 1 : index
    %c0_31 = arith.constant 0 : index
    %c0_32 = arith.constant 0 : index
    %25 = vector.load %arg6[%c0_29, %c1_30, %c0_31, %c0_32] : memref<2x4x1x32xf32, #tpu.memory_space<vmem>>, vector<1x1x1x32xf32>
    %26 = vector.shape_cast %25 : vector<1x1x1x32xf32> to vector<1x32xf32>
    %27 = vector.broadcast %26 : vector<1x32xf32> to vector<8x32xf32>
    %28 = arith.addf %24, %27 : vector<8x32xf32>
    %c0_33 = arith.constant 0 : index
    %c2 = arith.constant 2 : index
    %c0_34 = arith.constant 0 : index
    %c0_35 = arith.constant 0 : index
    %29 = vector.load %arg4[%c0_33, %c2, %c0_34, %c0_35] : memref<2x4x32x32xbf16, #tpu.memory_space<vmem>>, vector<1x1x32x32xbf16>
    %30 = vector.shape_cast %29 : vector<1x1x32x32xbf16> to vector<32x32xbf16>
    %cst_36 = arith.constant dense<0.000000e+00> : vector<8x32xf32>
    %31 = tpu.matmul %5, %30, %cst_36 {dimension_numbers = #tpu.dot_dimension_numbers<[1], [0], [0], [1], [0, 0, 1, 1], [], []>} : vector<8x32xbf16>, vector<32x32xbf16>, vector<8x32xf32> -> vector<8x32xf32>
    %c0_37 = arith.constant 0 : index
    %c2_38 = arith.constant 2 : index
    %c0_39 = arith.constant 0 : index
    %c0_40 = arith.constant 0 : index
    %32 = vector.load %arg5[%c0_37, %c2_38, %c0_39, %c0_40] : memref<2x4x32x32xbf16, #tpu.memory_space<vmem>>, vector<1x1x32x32xbf16>
    %33 = vector.shape_cast %32 : vector<1x1x32x32xbf16> to vector<32x32xbf16>
    %cst_41 = arith.constant dense<0.000000e+00> : vector<8x32xf32>
    %34 = tpu.matmul %6, %33, %cst_41 {dimension_numbers = #tpu.dot_dimension_numbers<[1], [0], [0], [1], [0, 0, 1, 1], [], []>} : vector<8x32xbf16>, vector<32x32xbf16>, vector<8x32xf32> -> vector<8x32xf32>
    %35 = arith.addf %31, %34 : vector<8x32xf32>
    %c0_42 = arith.constant 0 : index
    %c2_43 = arith.constant 2 : index
    %c0_44 = arith.constant 0 : index
    %c0_45 = arith.constant 0 : index
    %36 = vector.load %arg6[%c0_42, %c2_43, %c0_44, %c0_45] : memref<2x4x1x32xf32, #tpu.memory_space<vmem>>, vector<1x1x1x32xf32>
    %37 = vector.shape_cast %36 : vector<1x1x1x32xf32> to vector<1x32xf32>
    %38 = vector.broadcast %37 : vector<1x32xf32> to vector<8x32xf32>
    %39 = arith.addf %35, %38 : vector<8x32xf32>
    %c0_46 = arith.constant 0 : index
    %c3 = arith.constant 3 : index
    %c0_47 = arith.constant 0 : index
    %c0_48 = arith.constant 0 : index
    %40 = vector.load %arg4[%c0_46, %c3, %c0_47, %c0_48] : memref<2x4x32x32xbf16, #tpu.memory_space<vmem>>, vector<1x1x32x32xbf16>
    %41 = vector.shape_cast %40 : vector<1x1x32x32xbf16> to vector<32x32xbf16>
    %cst_49 = arith.constant dense<0.000000e+00> : vector<8x32xf32>
    %42 = tpu.matmul %5, %41, %cst_49 {dimension_numbers = #tpu.dot_dimension_numbers<[1], [0], [0], [1], [0, 0, 1, 1], [], []>} : vector<8x32xbf16>, vector<32x32xbf16>, vector<8x32xf32> -> vector<8x32xf32>
    %c0_50 = arith.constant 0 : index
    %c3_51 = arith.constant 3 : index
    %c0_52 = arith.constant 0 : index
    %c0_53 = arith.constant 0 : index
    %43 = vector.load %arg5[%c0_50, %c3_51, %c0_52, %c0_53] : memref<2x4x32x32xbf16, #tpu.memory_space<vmem>>, vector<1x1x32x32xbf16>
    %44 = vector.shape_cast %43 : vector<1x1x32x32xbf16> to vector<32x32xbf16>
    %cst_54 = arith.constant dense<0.000000e+00> : vector<8x32xf32>
    %45 = tpu.matmul %6, %44, %cst_54 {dimension_numbers = #tpu.dot_dimension_numbers<[1], [0], [0], [1], [0, 0, 1, 1], [], []>} : vector<8x32xbf16>, vector<32x32xbf16>, vector<8x32xf32> -> vector<8x32xf32>
    %46 = arith.addf %42, %45 : vector<8x32xf32>
    %c0_55 = arith.constant 0 : index
    %c3_56 = arith.constant 3 : index
    %c0_57 = arith.constant 0 : index
    %c0_58 = arith.constant 0 : index
    %47 = vector.load %arg6[%c0_55, %c3_56, %c0_57, %c0_58] : memref<2x4x1x32xf32, #tpu.memory_space<vmem>>, vector<1x1x1x32xf32>
    %48 = vector.shape_cast %47 : vector<1x1x1x32xf32> to vector<1x32xf32>
    %49 = vector.broadcast %48 : vector<1x32xf32> to vector<8x32xf32>
    %50 = arith.addf %46, %49 : vector<8x32xf32>
    %51 = arith.negf %17 : vector<8x32xf32>
    %52 = math.exp %51 : vector<8x32xf32>
    %cst_59 = arith.constant 1.000000e+00 : f32
    %53 = vector.broadcast %cst_59 : f32 to vector<8x32xf32>
    %54 = arith.addf %53, %52 : vector<8x32xf32>
    %55 = arith.divf %53, %54 : vector<8x32xf32>
    %56 = arith.negf %28 : vector<8x32xf32>
    %57 = math.exp %56 : vector<8x32xf32>
    %cst_60 = arith.constant 1.000000e+00 : f32
    %58 = vector.broadcast %cst_60 : f32 to vector<8x32xf32>
    %59 = arith.addf %58, %57 : vector<8x32xf32>
    %60 = arith.divf %58, %59 : vector<8x32xf32>
    %61 = math.tanh %39 : vector<8x32xf32>
    %62 = arith.negf %50 : vector<8x32xf32>
    %63 = math.exp %62 : vector<8x32xf32>
    %cst_61 = arith.constant 1.000000e+00 : f32
    %64 = vector.broadcast %cst_61 : f32 to vector<8x32xf32>
    %65 = arith.addf %64, %63 : vector<8x32xf32>
    %66 = arith.divf %64, %65 : vector<8x32xf32>
    %67 = arith.mulf %60, %4 : vector<8x32xf32>
    %68 = arith.mulf %55, %61 : vector<8x32xf32>
    %69 = arith.addf %67, %68 : vector<8x32xf32>
    %70 = math.tanh %69 : vector<8x32xf32>
    %71 = arith.mulf %66, %70 : vector<8x32xf32>
    %72 = arith.addf %71, %0 : vector<8x32xf32>
    %c1_62 = arith.constant 1 : index
    %c0_63 = arith.constant 0 : index
    %c0_64 = arith.constant 0 : index
    %73 = vector.load %arg2[%c1_62, %c0_63, %c0_64] : memref<2x8x32xf32, #tpu.memory_space<vmem>>, vector<1x8x32xf32>
    %74 = vector.shape_cast %73 : vector<1x8x32xf32> to vector<8x32xf32>
    %c1_65 = arith.constant 1 : index
    %c0_66 = arith.constant 0 : index
    %c0_67 = arith.constant 0 : index
    %75 = vector.load %arg3[%c1_65, %c0_66, %c0_67] : memref<2x8x32xf32, #tpu.memory_space<vmem>>, vector<1x8x32xf32>
    %76 = vector.shape_cast %75 : vector<1x8x32xf32> to vector<8x32xf32>
    %77 = arith.truncf %72 : vector<8x32xf32> to vector<8x32xbf16>
    %78 = arith.truncf %74 : vector<8x32xf32> to vector<8x32xbf16>
    %c1_68 = arith.constant 1 : index
    %c0_69 = arith.constant 0 : index
    %c0_70 = arith.constant 0 : index
    %c0_71 = arith.constant 0 : index
    %79 = vector.load %arg4[%c1_68, %c0_69, %c0_70, %c0_71] : memref<2x4x32x32xbf16, #tpu.memory_space<vmem>>, vector<1x1x32x32xbf16>
    %80 = vector.shape_cast %79 : vector<1x1x32x32xbf16> to vector<32x32xbf16>
    %cst_72 = arith.constant dense<0.000000e+00> : vector<8x32xf32>
    %81 = tpu.matmul %77, %80, %cst_72 {dimension_numbers = #tpu.dot_dimension_numbers<[1], [0], [0], [1], [0, 0, 1, 1], [], []>} : vector<8x32xbf16>, vector<32x32xbf16>, vector<8x32xf32> -> vector<8x32xf32>
    %c1_73 = arith.constant 1 : index
    %c0_74 = arith.constant 0 : index
    %c0_75 = arith.constant 0 : index
    %c0_76 = arith.constant 0 : index
    %82 = vector.load %arg5[%c1_73, %c0_74, %c0_75, %c0_76] : memref<2x4x32x32xbf16, #tpu.memory_space<vmem>>, vector<1x1x32x32xbf16>
    %83 = vector.shape_cast %82 : vector<1x1x32x32xbf16> to vector<32x32xbf16>
    %cst_77 = arith.constant dense<0.000000e+00> : vector<8x32xf32>
    %84 = tpu.matmul %78, %83, %cst_77 {dimension_numbers = #tpu.dot_dimension_numbers<[1], [0], [0], [1], [0, 0, 1, 1], [], []>} : vector<8x32xbf16>, vector<32x32xbf16>, vector<8x32xf32> -> vector<8x32xf32>
    %85 = arith.addf %81, %84 : vector<8x32xf32>
    %c1_78 = arith.constant 1 : index
    %c0_79 = arith.constant 0 : index
    %c0_80 = arith.constant 0 : index
    %c0_81 = arith.constant 0 : index
    %86 = vector.load %arg6[%c1_78, %c0_79, %c0_80, %c0_81] : memref<2x4x1x32xf32, #tpu.memory_space<vmem>>, vector<1x1x1x32xf32>
    %87 = vector.shape_cast %86 : vector<1x1x1x32xf32> to vector<1x32xf32>
    %88 = vector.broadcast %87 : vector<1x32xf32> to vector<8x32xf32>
    %89 = arith.addf %85, %88 : vector<8x32xf32>
    %c1_82 = arith.constant 1 : index
    %c1_83 = arith.constant 1 : index
    %c0_84 = arith.constant 0 : index
    %c0_85 = arith.constant 0 : index
    %90 = vector.load %arg4[%c1_82, %c1_83, %c0_84, %c0_85] : memref<2x4x32x32xbf16, #tpu.memory_space<vmem>>, vector<1x1x32x32xbf16>
    %91 = vector.shape_cast %90 : vector<1x1x32x32xbf16> to vector<32x32xbf16>
    %cst_86 = arith.constant dense<0.000000e+00> : vector<8x32xf32>
    %92 = tpu.matmul %77, %91, %cst_86 {dimension_numbers = #tpu.dot_dimension_numbers<[1], [0], [0], [1], [0, 0, 1, 1], [], []>} : vector<8x32xbf16>, vector<32x32xbf16>, vector<8x32xf32> -> vector<8x32xf32>
    %c1_87 = arith.constant 1 : index
    %c1_88 = arith.constant 1 : index
    %c0_89 = arith.constant 0 : index
    %c0_90 = arith.constant 0 : index
    %93 = vector.load %arg5[%c1_87, %c1_88, %c0_89, %c0_90] : memref<2x4x32x32xbf16, #tpu.memory_space<vmem>>, vector<1x1x32x32xbf16>
    %94 = vector.shape_cast %93 : vector<1x1x32x32xbf16> to vector<32x32xbf16>
    %cst_91 = arith.constant dense<0.000000e+00> : vector<8x32xf32>
    %95 = tpu.matmul %78, %94, %cst_91 {dimension_numbers = #tpu.dot_dimension_numbers<[1], [0], [0], [1], [0, 0, 1, 1], [], []>} : vector<8x32xbf16>, vector<32x32xbf16>, vector<8x32xf32> -> vector<8x32xf32>
    %96 = arith.addf %92, %95 : vector<8x32xf32>
    %c1_92 = arith.constant 1 : index
    %c1_93 = arith.constant 1 : index
    %c0_94 = arith.constant 0 : index
    %c0_95 = arith.constant 0 : index
    %97 = vector.load %arg6[%c1_92, %c1_93, %c0_94, %c0_95] : memref<2x4x1x32xf32, #tpu.memory_space<vmem>>, vector<1x1x1x32xf32>
    %98 = vector.shape_cast %97 : vector<1x1x1x32xf32> to vector<1x32xf32>
    %99 = vector.broadcast %98 : vector<1x32xf32> to vector<8x32xf32>
    %100 = arith.addf %96, %99 : vector<8x32xf32>
    %c1_96 = arith.constant 1 : index
    %c2_97 = arith.constant 2 : index
    %c0_98 = arith.constant 0 : index
    %c0_99 = arith.constant 0 : index
    %101 = vector.load %arg4[%c1_96, %c2_97, %c0_98, %c0_99] : memref<2x4x32x32xbf16, #tpu.memory_space<vmem>>, vector<1x1x32x32xbf16>
    %102 = vector.shape_cast %101 : vector<1x1x32x32xbf16> to vector<32x32xbf16>
    %cst_100 = arith.constant dense<0.000000e+00> : vector<8x32xf32>
    %103 = tpu.matmul %77, %102, %cst_100 {dimension_numbers = #tpu.dot_dimension_numbers<[1], [0], [0], [1], [0, 0, 1, 1], [], []>} : vector<8x32xbf16>, vector<32x32xbf16>, vector<8x32xf32> -> vector<8x32xf32>
    %c1_101 = arith.constant 1 : index
    %c2_102 = arith.constant 2 : index
    %c0_103 = arith.constant 0 : index
    %c0_104 = arith.constant 0 : index
    %104 = vector.load %arg5[%c1_101, %c2_102, %c0_103, %c0_104] : memref<2x4x32x32xbf16, #tpu.memory_space<vmem>>, vector<1x1x32x32xbf16>
    %105 = vector.shape_cast %104 : vector<1x1x32x32xbf16> to vector<32x32xbf16>
    %cst_105 = arith.constant dense<0.000000e+00> : vector<8x32xf32>
    %106 = tpu.matmul %78, %105, %cst_105 {dimension_numbers = #tpu.dot_dimension_numbers<[1], [0], [0], [1], [0, 0, 1, 1], [], []>} : vector<8x32xbf16>, vector<32x32xbf16>, vector<8x32xf32> -> vector<8x32xf32>
    %107 = arith.addf %103, %106 : vector<8x32xf32>
    %c1_106 = arith.constant 1 : index
    %c2_107 = arith.constant 2 : index
    %c0_108 = arith.constant 0 : index
    %c0_109 = arith.constant 0 : index
    %108 = vector.load %arg6[%c1_106, %c2_107, %c0_108, %c0_109] : memref<2x4x1x32xf32, #tpu.memory_space<vmem>>, vector<1x1x1x32xf32>
    %109 = vector.shape_cast %108 : vector<1x1x1x32xf32> to vector<1x32xf32>
    %110 = vector.broadcast %109 : vector<1x32xf32> to vector<8x32xf32>
    %111 = arith.addf %107, %110 : vector<8x32xf32>
    %c1_110 = arith.constant 1 : index
    %c3_111 = arith.constant 3 : index
    %c0_112 = arith.constant 0 : index
    %c0_113 = arith.constant 0 : index
    %112 = vector.load %arg4[%c1_110, %c3_111, %c0_112, %c0_113] : memref<2x4x32x32xbf16, #tpu.memory_space<vmem>>, vector<1x1x32x32xbf16>
    %113 = vector.shape_cast %112 : vector<1x1x32x32xbf16> to vector<32x32xbf16>
    %cst_114 = arith.constant dense<0.000000e+00> : vector<8x32xf32>
    %114 = tpu.matmul %77, %113, %cst_114 {dimension_numbers = #tpu.dot_dimension_numbers<[1], [0], [0], [1], [0, 0, 1, 1], [], []>} : vector<8x32xbf16>, vector<32x32xbf16>, vector<8x32xf32> -> vector<8x32xf32>
    %c1_115 = arith.constant 1 : index
    %c3_116 = arith.constant 3 : index
    %c0_117 = arith.constant 0 : index
    %c0_118 = arith.constant 0 : index
    %115 = vector.load %arg5[%c1_115, %c3_116, %c0_117, %c0_118] : memref<2x4x32x32xbf16, #tpu.memory_space<vmem>>, vector<1x1x32x32xbf16>
    %116 = vector.shape_cast %115 : vector<1x1x32x32xbf16> to vector<32x32xbf16>
    %cst_119 = arith.constant dense<0.000000e+00> : vector<8x32xf32>
    %117 = tpu.matmul %78, %116, %cst_119 {dimension_numbers = #tpu.dot_dimension_numbers<[1], [0], [0], [1], [0, 0, 1, 1], [], []>} : vector<8x32xbf16>, vector<32x32xbf16>, vector<8x32xf32> -> vector<8x32xf32>
    %118 = arith.addf %114, %117 : vector<8x32xf32>
    %c1_120 = arith.constant 1 : index
    %c3_121 = arith.constant 3 : index
    %c0_122 = arith.constant 0 : index
    %c0_123 = arith.constant 0 : index
    %119 = vector.load %arg6[%c1_120, %c3_121, %c0_122, %c0_123] : memref<2x4x1x32xf32, #tpu.memory_space<vmem>>, vector<1x1x1x32xf32>
    %120 = vector.shape_cast %119 : vector<1x1x1x32xf32> to vector<1x32xf32>
    %121 = vector.broadcast %120 : vector<1x32xf32> to vector<8x32xf32>
    %122 = arith.addf %118, %121 : vector<8x32xf32>
    %123 = arith.negf %89 : vector<8x32xf32>
    %124 = math.exp %123 : vector<8x32xf32>
    %cst_124 = arith.constant 1.000000e+00 : f32
    %125 = vector.broadcast %cst_124 : f32 to vector<8x32xf32>
    %126 = arith.addf %125, %124 : vector<8x32xf32>
    %127 = arith.divf %125, %126 : vector<8x32xf32>
    %128 = arith.negf %100 : vector<8x32xf32>
    %129 = math.exp %128 : vector<8x32xf32>
    %cst_125 = arith.constant 1.000000e+00 : f32
    %130 = vector.broadcast %cst_125 : f32 to vector<8x32xf32>
    %131 = arith.addf %130, %129 : vector<8x32xf32>
    %132 = arith.divf %130, %131 : vector<8x32xf32>
    %133 = math.tanh %111 : vector<8x32xf32>
    %134 = arith.negf %122 : vector<8x32xf32>
    %135 = math.exp %134 : vector<8x32xf32>
    %cst_126 = arith.constant 1.000000e+00 : f32
    %136 = vector.broadcast %cst_126 : f32 to vector<8x32xf32>
    %137 = arith.addf %136, %135 : vector<8x32xf32>
    %138 = arith.divf %136, %137 : vector<8x32xf32>
    %139 = arith.mulf %132, %76 : vector<8x32xf32>
    %140 = arith.mulf %127, %133 : vector<8x32xf32>
    %141 = arith.addf %139, %140 : vector<8x32xf32>
    %142 = math.tanh %141 : vector<8x32xf32>
    %143 = arith.mulf %138, %142 : vector<8x32xf32>
    %c0_127 = arith.constant 0 : index
    %c0_128 = arith.constant 0 : index
    %144 = vector.load %arg7[%c0_127, %c0_128] : memref<8x32xf32, #tpu.memory_space<vmem>>, vector<8x32xf32>
    tpu.vector_store %arg7[%c0_127, %c0_128], %143 {strides = array<i32>} : memref<8x32xf32, #tpu.memory_space<vmem>>, vector<8x32xf32>,
    %c0_129 = arith.constant 0 : index
    %c0_130 = arith.constant 0 : index
    %145 = vector.load %arg8[%c0_129, %c0_130] : memref<8x32xf32, #tpu.memory_space<vmem>>, vector<8x32xf32>
    tpu.vector_store %arg8[%c0_129, %c0_130], %141 {strides = array<i32>} : memref<8x32xf32, #tpu.memory_space<vmem>>, vector<8x32xf32>,
    return
  }
  func.func @transform_0(%arg0: i32) -> (i32, i32) {
    %c0_i32 = arith.constant 0 : i32
    %c0_i32_0 = arith.constant 0 : i32
    return %arg0, %c0_i32 : i32, i32
  }
  func.func @transform_1(%arg0: i32) -> (i32, i32, i32) {
    %c0_i32 = arith.constant 0 : i32
    %c0_i32_0 = arith.constant 0 : i32
    %c0_i32_1 = arith.constant 0 : i32
    return %c0_i32, %arg0, %c0_i32_0 : i32, i32, i32
  }
  func.func @transform_2(%arg0: i32) -> (i32, i32, i32) {
    %c0_i32 = arith.constant 0 : i32
    %c0_i32_0 = arith.constant 0 : i32
    %c0_i32_1 = arith.constant 0 : i32
    return %c0_i32, %arg0, %c0_i32_0 : i32, i32, i32
  }
  func.func @transform_3(%arg0: i32) -> (i32, i32, i32, i32) {
    %c0_i32 = arith.constant 0 : i32
    %c0_i32_0 = arith.constant 0 : i32
    %c0_i32_1 = arith.constant 0 : i32
    %c0_i32_2 = arith.constant 0 : i32
    %c0_i32_3 = arith.constant 0 : i32
    return %c0_i32, %c0_i32_0, %c0_i32_1, %c0_i32_2 : i32, i32, i32, i32
  }
  func.func @transform_4(%arg0: i32) -> (i32, i32, i32, i32) {
    %c0_i32 = arith.constant 0 : i32
    %c0_i32_0 = arith.constant 0 : i32
    %c0_i32_1 = arith.constant 0 : i32
    %c0_i32_2 = arith.constant 0 : i32
    %c0_i32_3 = arith.constant 0 : i32
    return %c0_i32, %c0_i32_0, %c0_i32_1, %c0_i32_2 : i32, i32, i32, i32
  }
  func.func @transform_5(%arg0: i32) -> (i32, i32, i32, i32) {
    %c0_i32 = arith.constant 0 : i32
    %c0_i32_0 = arith.constant 0 : i32
    %c0_i32_1 = arith.constant 0 : i32
    %c0_i32_2 = arith.constant 0 : i32
    %c0_i32_3 = arith.constant 0 : i32
    return %c0_i32, %c0_i32_0, %c0_i32_1, %c0_i32_2 : i32, i32, i32, i32
  }
  func.func @transform_6(%arg0: i32) -> (i32, i32) {
    %c0_i32 = arith.constant 0 : i32
    %c0_i32_0 = arith.constant 0 : i32
    return %arg0, %c0_i32 : i32, i32
  }
  func.func @transform_7(%arg0: i32) -> (i32, i32) {
    %c0_i32 = arith.constant 0 : i32
    %c0_i32_0 = arith.constant 0 : i32
    return %arg0, %c0_i32 : i32, i32
  }
}

</mosaic_0001>

<llo_original>
// kernel: skip_lstm_forward.1
$region0: #{skip_lstm_forward.1}
  #allocation0 [shape = 'u32[]', space=smem, size = 0x4, offset = 0x4, fixed_abs, tag = 'smem constant byte address 0x4 - core index']
  #allocation1 [shape = 'u32[144,128]{1,0:T(1,128)}', space=vmem, size = 0x12000, scoped, tag = 'internal scratch']
  %s0 = inlined_call_operand.vmem [shape: f32[8,32], index: 0, kind: input, shape index: {}]
  %s1 = inlined_call_operand.vmem [shape: f32[2,8,32], index: 1, kind: input, shape index: {}]
  %s2 = inlined_call_operand.vmem [shape: f32[2,8,32], index: 2, kind: input, shape index: {}]
  %s3 = inlined_call_operand.hbm [shape: bf16[2,4,32,32], index: 3, kind: input, shape index: {}]
  %s4 = inlined_call_operand.hbm [shape: bf16[2,4,32,32], index: 4, kind: input, shape index: {}]
  %s5 = inlined_call_operand.vmem [shape: f32[2,4,1,32], index: 5, kind: input, shape index: {}]
  %s6 = inlined_call_operand.hbm [shape: f32[8,32], index: 6, kind: output, shape index: {0}]
  %s7 = inlined_call_operand.hbm [shape: f32[8,32], index: 7, kind: output, shape index: {1}]
  %8 = xla_tuple %s6, %s7
  %s9 = sld [smem:[#allocation0]]
  $region50: #{skip_lstm_forward.1} parent=0
    _
  %s11 = ssub.s32 1, %s9
  %s12 = scalar_select 0, %s11, %s9
  $region1: #{skip_lstm_forward.1} parent=0
    #allocation2 [shape = 'u8[65536]{0}', space=vmem, size = 0x10000, scoped, tag = 'input window, operand 3, single buffered']
    #allocation3 [shape = 's32[1]{0}', space=sflag, size = 0x4, scoped, tag = 'scoped memory for skip_lstm_forward.1']
    #allocation4 [shape = 's32[1]{0}', space=sflag, size = 0x4, scoped, tag = 'scoped memory for skip_lstm_forward.1']
    #allocation5 [shape = 'u8[65536]{0}', space=vmem, size = 0x10000, scoped, tag = 'input window, operand 4, single buffered']
    #allocation6 [shape = 's32[1]{0}', space=sflag, size = 0x4, scoped, tag = 'scoped memory for skip_lstm_forward.1']
    #allocation7 [shape = 'u8[4096]{0}', space=vmem, size = 0x1000, scoped, tag = 'output window, operand 0, single buffered']
    #allocation8 [shape = 'u8[4096]{0}', space=vmem, size = 0x1000, scoped, tag = 'output window, operand 1, single buffered']
    #allocation9 [shape = 's32[1]{0}', space=sflag, size = 0x4, scoped, tag = 'scoped memory for skip_lstm_forward.1']
    %13 = vsyncpa [#allocation3], 0
    %14 = vsyncpa [#allocation6], 0
    %15 = vsyncpa [#allocation4], 0
    %16 = vsyncpa [#allocation9], 0
    // Predicated region
    $region2: #{skip_lstm_forward.1} parent=1 // pred_check
      _
    $region3: #{skip_lstm_forward.1} parent=1 // pred_check_branch
      %18 = sbr.rel (0) target = $region5
    $region4: #{skip_lstm_forward.1} parent=1 // pred_region
      _
    $region5: #{skip_lstm_forward.1} parent=1 // pred_fallthru
      _
    // Predicated region
    $region6: #{skip_lstm_forward.1} parent=1 // pred_check
      _
    $region7: #{skip_lstm_forward.1} parent=1 // pred_check_branch
      %20 = sbr.rel (0) target = $region9
    $region8: #{skip_lstm_forward.1} parent=1 // pred_region
      _
    $region9: #{skip_lstm_forward.1} parent=1 // pred_fallthru
      _
    // Predicated region
    $region10: #{skip_lstm_forward.1} parent=1 // pred_check
      _
    $region11: #{skip_lstm_forward.1} parent=1 // pred_check_branch
      %22 = sbr.rel (0) target = $region13
    $region12: #{skip_lstm_forward.1} parent=1 // pred_region
      _
    $region13: #{skip_lstm_forward.1} parent=1 // pred_fallthru
      _
    // Predicated region
    $region14: #{skip_lstm_forward.1} parent=1 // pred_check
      _
    $region15: #{skip_lstm_forward.1} parent=1 // pred_check_branch
      %24 = sbr.rel (0) target = $region17
    $region16: #{skip_lstm_forward.1} parent=1 // pred_region
      %s26 = ssub.s32 2048, 2048
      %27 = vsyncadd [#allocation3], %s26
      %s28 = sshll.u32 [#allocation2], 4
      %s29 = int_to_ptr.vmem [resolvable:$true] %s28
      %34 = dma.hbm_to_vmem [thread:$0]  %s3, 2048, %s29, [#allocation3], 64, 64, 4
    $region17: #{skip_lstm_forward.1} parent=1 // pred_fallthru
      _
    // Predicated region
    $region18: #{skip_lstm_forward.1} parent=1 // pred_check
      _
    $region19: #{skip_lstm_forward.1} parent=1 // pred_check_branch
      %36 = sbr.rel (0) target = $region21
    $region20: #{skip_lstm_forward.1} parent=1 // pred_region
      %s38 = ssub.s32 2048, 2048
      %39 = vsyncadd [#allocation6], %s38
      %s40 = sshll.u32 [#allocation5], 4
      %s41 = int_to_ptr.vmem [resolvable:$true] %s40
      %46 = dma.hbm_to_vmem [thread:$0]  %s4, 2048, %s41, [#allocation6], 64, 64, 4
    $region21: #{skip_lstm_forward.1} parent=1 // pred_fallthru
      _
    // Predicated region
    $region22: #{skip_lstm_forward.1} parent=1 // pred_check
      _
    $region23: #{skip_lstm_forward.1} parent=1 // pred_check_branch
      %48 = sbr.rel (0) target = $region25
    $region24: #{skip_lstm_forward.1} parent=1 // pred_region
      _
    $region25: #{skip_lstm_forward.1} parent=1 // pred_fallthru
      _
    // Predicated region
    $region26: #{skip_lstm_forward.1} parent=1 // pred_check
      _
    $region27: #{skip_lstm_forward.1} parent=1 // pred_check_branch
      %50 = sbr.rel (0) target = $region29
    $region28: #{skip_lstm_forward.1} parent=1 // pred_region
      %51 = dma.done [#allocation3], 2048
    $region29: #{skip_lstm_forward.1} parent=1 // pred_fallthru
      _
    // Predicated region
    $region30: #{skip_lstm_forward.1} parent=1 // pred_check
      _
    $region31: #{skip_lstm_forward.1} parent=1 // pred_check_branch
      %53 = sbr.rel (0) target = $region33
    $region32: #{skip_lstm_forward.1} parent=1 // pred_region
      %54 = dma.done [#allocation6], 2048
    $region33: #{skip_lstm_forward.1} parent=1 // pred_fallthru
      _
    %v56 = vld [vmem:[%s0] sm:$0xff]
    %v57 = vld [vmem:[%s1] sm:$0xff]
    %v58 = vld [vmem:[%s2] sm:$0xff]
    %v59 = vpack.c.bf16 %v56, %v56
    %v60 = vpack.c.bf16 %v57, %v57
    %v61 = vld [vmem:[#allocation2] sm:$0xf]
    %v62 = vld [vmem:[#allocation2 + $0x4] sm:$0xf]
    %v63 = vld [vmem:[#allocation2 + $0x8] sm:$0xf]
    %v64 = vld [vmem:[#allocation2 + $0xc] sm:$0xf]
    %v65 = vld [vmem:[#allocation5] sm:$0xf]
    %v66 = vld [vmem:[#allocation5 + $0x4] sm:$0xf]
    %v67 = vld [vmem:[#allocation5 + $0x8] sm:$0xf]
    %v68 = vld [vmem:[#allocation5 + $0xc] sm:$0xf]
    %v73 = vunpack.c.l.b16 %v65
    %v74 = vunpack.c.l.b16 %v66
    %v75 = vunpack.c.l.b16 %v67
    %v76 = vunpack.c.l.b16 %v68
    %v77 = vpack.c.b16 %v74, %v73
    %v78 = vpack.c.b16 %v76, %v75
    %vm81 = vcmask 261120
    %v83 = vsel %vm81, %v60, 0
    %85 = vmatprep.subr.bf16.mxu0 0
    %86 = vmatpush1.bf16.msra.mxu0 0
    %87 = vmatprep.subr.bf16.mxu0 0
    %88 = vmatpush1.bf16.msra.mxu0 0
    %89 = vmatprep.subr.bf16.mxu0 0
    %90 = vmatpush1.bf16.msra.mxu0 0
    %91 = vmatprep.subr.bf16.mxu0 0
    %92 = vmatpush1.bf16.msra.mxu0 0
    %93 = vmatprep.subr.bf16.mxu0 0
    %94 = vmatpush1.bf16.msra.mxu0 0
    %95 = vmatprep.subr.bf16.mxu0 0
    %96 = vmatpush1.bf16.msra.mxu0 0
    %97 = vmatprep.subr.bf16.mxu0 0
    %98 = vmatpush1.bf16.msra.mxu0 %v78
    %99 = vmatprep.subr.bf16.mxu0 0
    %100 = vmatpush1.bf16.msra.mxu0 %v77
    %101 = vmatprep.subr.bf16.mxu0 0
    %102 = vmatpush2.bf16.msra.mxu0 0
    %103 = vmatprep.subr.bf16.mxu0 0
    %104 = vmatpush2.bf16.msra.mxu0 0
    %105 = vmatprep.subr.bf16.mxu0 0
    %106 = vmatpush2.bf16.msra.mxu0 0
    %107 = vmatprep.subr.bf16.mxu0 0
    %108 = vmatpush2.bf16.msra.mxu0 0
    %109 = vmatprep.subr.bf16.mxu0 0
    %110 = vmatpush2.bf16.msra.mxu0 0
    %111 = vmatprep.subr.bf16.mxu0 0
    %112 = vmatpush2.bf16.msra.mxu0 0
    %113 = vmatprep.subr.bf16.mxu0 0
    %114 = vmatpush2.bf16.msra.mxu0 0
    %115 = vmatprep.subr.bf16.mxu0 0
    %116 = vmatpush2.bf16.msra.mxu0 0
    %117 = vmatprep.mubr.bf16.mxu0 0
    %118 = vmatmul.mubr.bf16.gmra.mxu0 %v83
    %v119 = vpop.f32.mrf.mxu0
    %v120 = vadd.f32 0.0, %v119
    %v121 = vpop.f32.mrf.mxu0
    %v122 = vpop.f32.mrf.mxu0
    %v123 = vpop.f32.mrf.mxu0
    %124 = vdwg.mxu0
    %v129 = vunpack.c.l.b16 %v61
    %v130 = vunpack.c.l.b16 %v62
    %v131 = vunpack.c.l.b16 %v63
    %v132 = vunpack.c.l.b16 %v64
    %v133 = vpack.c.b16 %v130, %v129
    %v134 = vpack.c.b16 %v132, %v131
    %v138 = vsel %vm81, %v59, 0
    %140 = vmatprep.subr.bf16.mxu0 0
    %141 = vmatpush1.bf16.msra.mxu0 0
    %142 = vmatprep.subr.bf16.mxu0 0
    %143 = vmatpush1.bf16.msra.mxu0 0
    %144 = vmatprep.subr.bf16.mxu0 0
    %145 = vmatpush1.bf16.msra.mxu0 0
    %146 = vmatprep.subr.bf16.mxu0 0
    %147 = vmatpush1.bf16.msra.mxu0 0
    %148 = vmatprep.subr.bf16.mxu0 0
    %149 = vmatpush1.bf16.msra.mxu0 0
    %150 = vmatprep.subr.bf16.mxu0 0
    %151 = vmatpush1.bf16.msra.mxu0 0
    %152 = vmatprep.subr.bf16.mxu0 0
    %153 = vmatpush1.bf16.msra.mxu0 %v134
    %154 = vmatprep.subr.bf16.mxu0 0
    %155 = vmatpush1.bf16.msra.mxu0 %v133
    %156 = vmatprep.subr.bf16.mxu0 0
    %157 = vmatpush2.bf16.msra.mxu0 0
    %158 = vmatprep.subr.bf16.mxu0 0
    %159 = vmatpush2.bf16.msra.mxu0 0
    %160 = vmatprep.subr.bf16.mxu0 0
    %161 = vmatpush2.bf16.msra.mxu0 0
    %162 = vmatprep.subr.bf16.mxu0 0
    %163 = vmatpush2.bf16.msra.mxu0 0
    %164 = vmatprep.subr.bf16.mxu0 0
    %165 = vmatpush2.bf16.msra.mxu0 0
    %166 = vmatprep.subr.bf16.mxu0 0
    %167 = vmatpush2.bf16.msra.mxu0 0
    %168 = vmatprep.subr.bf16.mxu0 0
    %169 = vmatpush2.bf16.msra.mxu0 0
    %170 = vmatprep.subr.bf16.mxu0 0
    %171 = vmatpush2.bf16.msra.mxu0 0
    %172 = vmatprep.mubr.bf16.mxu0 0
    %173 = vmatmul.mubr.bf16.gmra.mxu0 %v138
    %v174 = vpop.f32.mrf.mxu0
    %v175 = vadd.f32 %v120, %v174
    %v176 = vpop.f32.mrf.mxu0
    %v177 = vpop.f32.mrf.mxu0
    %v178 = vpop.f32.mrf.mxu0
    %179 = vdwg.mxu0
    %v180 = vld [vmem:[%s5] sm:$0x1]
    %v182 = vlaneseq
    %v183 = vshrl.u32 %v182, 7
    %v184 = vsub.s32 0, %v183
    %v185 = vrot.slane %v180, %v184
    %v187 = vadd.f32 %v175, %v185
    %s188 = scalar_lea.vmem [#allocation2], 16
    %v189 = vld [vmem:[%s188] sm:$0xf]
    %v190 = vld [vmem:[%s188 + $0x4] sm:$0xf]
    %v191 = vld [vmem:[%s188 + $0x8] sm:$0xf]
    %v192 = vld [vmem:[%s188 + $0xc] sm:$0xf]
    %s193 = scalar_lea.vmem [#allocation5], 16
    %v194 = vld [vmem:[%s193] sm:$0xf]
    %v195 = vld [vmem:[%s193 + $0x4] sm:$0xf]
    %v196 = vld [vmem:[%s193 + $0x8] sm:$0xf]
    %v197 = vld [vmem:[%s193 + $0xc] sm:$0xf]
    %v202 = vunpack.c.l.b16 %v194
    %v203 = vunpack.c.l.b16 %v195
    %v204 = vunpack.c.l.b16 %v196
    %v205 = vunpack.c.l.b16 %v197
    %v206 = vpack.c.b16 %v203, %v202
    %v207 = vpack.c.b16 %v205, %v204
    %210 = vmatprep.subr.bf16.mxu0 0
    %211 = vmatpush1.bf16.msra.mxu0 0
    %212 = vmatprep.subr.bf16.mxu0 0
    %213 = vmatpush1.bf16.msra.mxu0 0
    %214 = vmatprep.subr.bf16.mxu0 0
    %215 = vmatpush1.bf16.msra.mxu0 0
    %216 = vmatprep.subr.bf16.mxu0 0
    %217 = vmatpush1.bf16.msra.mxu0 0
    %218 = vmatprep.subr.bf16.mxu0 0
    %219 = vmatpush1.bf16.msra.mxu0 0
    %220 = vmatprep.subr.bf16.mxu0 0
    %221 = vmatpush1.bf16.msra.mxu0 0
    %222 = vmatprep.subr.bf16.mxu0 0
    %223 = vmatpush1.bf16.msra.mxu0 %v207
    %224 = vmatprep.subr.bf16.mxu0 0
    %225 = vmatpush1.bf16.msra.mxu0 %v206
    %226 = vmatprep.subr.bf16.mxu0 0
    %227 = vmatpush2.bf16.msra.mxu0 0
    %228 = vmatprep.subr.bf16.mxu0 0
    %229 = vmatpush2.bf16.msra.mxu0 0
    %230 = vmatprep.subr.bf16.mxu0 0
    %231 = vmatpush2.bf16.msra.mxu0 0
    %232 = vmatprep.subr.bf16.mxu0 0
    %233 = vmatpush2.bf16.msra.mxu0 0
    %234 = vmatprep.subr.bf16.mxu0 0
    %235 = vmatpush2.bf16.msra.mxu0 0
    %236 = vmatprep.subr.bf16.mxu0 0
    %237 = vmatpush2.bf16.msra.mxu0 0
    %238 = vmatprep.subr.bf16.mxu0 0
    %239 = vmatpush2.bf16.msra.mxu0 0
    %240 = vmatprep.subr.bf16.mxu0 0
    %241 = vmatpush2.bf16.msra.mxu0 0
    %242 = vmatprep.mubr.bf16.mxu0 0
    %243 = vmatmul.mubr.bf16.gmra.mxu0 %v83
    %v244 = vpop.f32.mrf.mxu0
    %v245 = vadd.f32 0.0, %v244
    %v246 = vpop.f32.mrf.mxu0
    %v247 = vpop.f32.mrf.mxu0
    %v248 = vpop.f32.mrf.mxu0
    %249 = vdwg.mxu0
    %v254 = vunpack.c.l.b16 %v189
    %v255 = vunpack.c.l.b16 %v190
    %v256 = vunpack.c.l.b16 %v191
    %v257 = vunpack.c.l.b16 %v192
    %v258 = vpack.c.b16 %v255, %v254
    %v259 = vpack.c.b16 %v257, %v256
    %262 = vmatprep.subr.bf16.mxu0 0
    %263 = vmatpush1.bf16.msra.mxu0 0
    %264 = vmatprep.subr.bf16.mxu0 0
    %265 = vmatpush1.bf16.msra.mxu0 0
    %266 = vmatprep.subr.bf16.mxu0 0
    %267 = vmatpush1.bf16.msra.mxu0 0
    %268 = vmatprep.subr.bf16.mxu0 0
    %269 = vmatpush1.bf16.msra.mxu0 0
    %270 = vmatprep.subr.bf16.mxu0 0
    %271 = vmatpush1.bf16.msra.mxu0 0
    %272 = vmatprep.subr.bf16.mxu0 0
    %273 = vmatpush1.bf16.msra.mxu0 0
    %274 = vmatprep.subr.bf16.mxu0 0
    %275 = vmatpush1.bf16.msra.mxu0 %v259
    %276 = vmatprep.subr.bf16.mxu0 0
    %277 = vmatpush1.bf16.msra.mxu0 %v258
    %278 = vmatprep.subr.bf16.mxu0 0
    %279 = vmatpush2.bf16.msra.mxu0 0
    %280 = vmatprep.subr.bf16.mxu0 0
    %281 = vmatpush2.bf16.msra.mxu0 0
    %282 = vmatprep.subr.bf16.mxu0 0
    %283 = vmatpush2.bf16.msra.mxu0 0
    %284 = vmatprep.subr.bf16.mxu0 0
    %285 = vmatpush2.bf16.msra.mxu0 0
    %286 = vmatprep.subr.bf16.mxu0 0
    %287 = vmatpush2.bf16.msra.mxu0 0
    %288 = vmatprep.subr.bf16.mxu0 0
    %289 = vmatpush2.bf16.msra.mxu0 0
    %290 = vmatprep.subr.bf16.mxu0 0
    %291 = vmatpush2.bf16.msra.mxu0 0
    %292 = vmatprep.subr.bf16.mxu0 0
    %293 = vmatpush2.bf16.msra.mxu0 0
    %294 = vmatprep.mubr.bf16.mxu0 0
    %295 = vmatmul.mubr.bf16.gmra.mxu0 %v138
    %v296 = vpop.f32.mrf.mxu0
    %v297 = vadd.f32 %v245, %v296
    %v298 = vpop.f32.mrf.mxu0
    %v299 = vpop.f32.mrf.mxu0
    %v300 = vpop.f32.mrf.mxu0
    %301 = vdwg.mxu0
    %s302 = scalar_lea.vmem %s5, 1
    %v303 = vld [vmem:[%s302] sm:$0x1]
    %v305 = vlaneseq
    %v306 = vshrl.u32 %v305, 7
    %v307 = vsub.s32 0, %v306
    %v308 = vrot.slane %v303, %v307
    %v310 = vadd.f32 %v297, %v308
    %s311 = scalar_lea.vmem [#allocation2], 32
    %v312 = vld [vmem:[%s311] sm:$0xf]
    %v313 = vld [vmem:[%s311 + $0x4] sm:$0xf]
    %v314 = vld [vmem:[%s311 + $0x8] sm:$0xf]
    %v315 = vld [vmem:[%s311 + $0xc] sm:$0xf]
    %s316 = scalar_lea.vmem [#allocation5], 32
    %v317 = vld [vmem:[%s316] sm:$0xf]
    %v318 = vld [vmem:[%s316 + $0x4] sm:$0xf]
    %v319 = vld [vmem:[%s316 + $0x8] sm:$0xf]
    %v320 = vld [vmem:[%s316 + $0xc] sm:$0xf]
    %v325 = vunpack.c.l.b16 %v317
    %v326 = vunpack.c.l.b16 %v318
    %v327 = vunpack.c.l.b16 %v319
    %v328 = vunpack.c.l.b16 %v320
    %v329 = vpack.c.b16 %v326, %v325
    %v330 = vpack.c.b16 %v328, %v327
    %333 = vmatprep.subr.bf16.mxu0 0
    %334 = vmatpush1.bf16.msra.mxu0 0
    %335 = vmatprep.subr.bf16.mxu0 0
    %336 = vmatpush1.bf16.msra.mxu0 0
    %337 = vmatprep.subr.bf16.mxu0 0
    %338 = vmatpush1.bf16.msra.mxu0 0
    %339 = vmatprep.subr.bf16.mxu0 0
    %340 = vmatpush1.bf16.msra.mxu0 0
    %341 = vmatprep.subr.bf16.mxu0 0
    %342 = vmatpush1.bf16.msra.mxu0 0
    %343 = vmatprep.subr.bf16.mxu0 0
    %344 = vmatpush1.bf16.msra.mxu0 0
    %345 = vmatprep.subr.bf16.mxu0 0
    %346 = vmatpush1.bf16.msra.mxu0 %v330
    %347 = vmatprep.subr.bf16.mxu0 0
    %348 = vmatpush1.bf16.msra.mxu0 %v329
    %349 = vmatprep.subr.bf16.mxu0 0
    %350 = vmatpush2.bf16.msra.mxu0 0
    %351 = vmatprep.subr.bf16.mxu0 0
    %352 = vmatpush2.bf16.msra.mxu0 0
    %353 = vmatprep.subr.bf16.mxu0 0
    %354 = vmatpush2.bf16.msra.mxu0 0
    %355 = vmatprep.subr.bf16.mxu0 0
    %356 = vmatpush2.bf16.msra.mxu0 0
    %357 = vmatprep.subr.bf16.mxu0 0
    %358 = vmatpush2.bf16.msra.mxu0 0
    %359 = vmatprep.subr.bf16.mxu0 0
    %360 = vmatpush2.bf16.msra.mxu0 0
    %361 = vmatprep.subr.bf16.mxu0 0
    %362 = vmatpush2.bf16.msra.mxu0 0
    %363 = vmatprep.subr.bf16.mxu0 0
    %364 = vmatpush2.bf16.msra.mxu0 0
    %365 = vmatprep.mubr.bf16.mxu0 0
    %366 = vmatmul.mubr.bf16.gmra.mxu0 %v83
    %v367 = vpop.f32.mrf.mxu0
    %v368 = vadd.f32 0.0, %v367
    %v369 = vpop.f32.mrf.mxu0
    %v370 = vpop.f32.mrf.mxu0
    %v371 = vpop.f32.mrf.mxu0
    %372 = vdwg.mxu0
    %v377 = vunpack.c.l.b16 %v312
    %v378 = vunpack.c.l.b16 %v313
    %v379 = vunpack.c.l.b16 %v314
    %v380 = vunpack.c.l.b16 %v315
    %v381 = vpack.c.b16 %v378, %v377
    %v382 = vpack.c.b16 %v380, %v379
    %385 = vmatprep.subr.bf16.mxu0 0
    %386 = vmatpush1.bf16.msra.mxu0 0
    %387 = vmatprep.subr.bf16.mxu0 0
    %388 = vmatpush1.bf16.msra.mxu0 0
    %389 = vmatprep.subr.bf16.mxu0 0
    %390 = vmatpush1.bf16.msra.mxu0 0
    %391 = vmatprep.subr.bf16.mxu0 0
    %392 = vmatpush1.bf16.msra.mxu0 0
    %393 = vmatprep.subr.bf16.mxu0 0
    %394 = vmatpush1.bf16.msra.mxu0 0
    %395 = vmatprep.subr.bf16.mxu0 0
    %396 = vmatpush1.bf16.msra.mxu0 0
    %397 = vmatprep.subr.bf16.mxu0 0
    %398 = vmatpush1.bf16.msra.mxu0 %v382
    %399 = vmatprep.subr.bf16.mxu0 0
    %400 = vmatpush1.bf16.msra.mxu0 %v381
    %401 = vmatprep.subr.bf16.mxu0 0
    %402 = vmatpush2.bf16.msra.mxu0 0
    %403 = vmatprep.subr.bf16.mxu0 0
    %404 = vmatpush2.bf16.msra.mxu0 0
    %405 = vmatprep.subr.bf16.mxu0 0
    %406 = vmatpush2.bf16.msra.mxu0 0
    %407 = vmatprep.subr.bf16.mxu0 0
    %408 = vmatpush2.bf16.msra.mxu0 0
    %409 = vmatprep.subr.bf16.mxu0 0
    %410 = vmatpush2.bf16.msra.mxu0 0
    %411 = vmatprep.subr.bf16.mxu0 0
    %412 = vmatpush2.bf16.msra.mxu0 0
    %413 = vmatprep.subr.bf16.mxu0 0
    %414 = vmatpush2.bf16.msra.mxu0 0
    %415 = vmatprep.subr.bf16.mxu0 0
    %416 = vmatpush2.bf16.msra.mxu0 0
    %417 = vmatprep.mubr.bf16.mxu0 0
    %418 = vmatmul.mubr.bf16.gmra.mxu0 %v138
    %v419 = vpop.f32.mrf.mxu0
    %v420 = vadd.f32 %v368, %v419
    %v421 = vpop.f32.mrf.mxu0
    %v422 = vpop.f32.mrf.mxu0
    %v423 = vpop.f32.mrf.mxu0
    %424 = vdwg.mxu0
    %s425 = scalar_lea.vmem %s5, 2
    %v426 = vld [vmem:[%s425] sm:$0x1]
    %v428 = vlaneseq
    %v429 = vshrl.u32 %v428, 7
    %v430 = vsub.s32 0, %v429
    %v431 = vrot.slane %v426, %v430
    %v433 = vadd.f32 %v420, %v431
    %s434 = scalar_lea.vmem [#allocation2], 48
    %v435 = vld [vmem:[%s434] sm:$0xf]
    %v436 = vld [vmem:[%s434 + $0x4] sm:$0xf]
    %v437 = vld [vmem:[%s434 + $0x8] sm:$0xf]
    %v438 = vld [vmem:[%s434 + $0xc] sm:$0xf]
    %s439 = scalar_lea.vmem [#allocation5], 48
    %v440 = vld [vmem:[%s439] sm:$0xf]
    %v441 = vld [vmem:[%s439 + $0x4] sm:$0xf]
    %v442 = vld [vmem:[%s439 + $0x8] sm:$0xf]
    %v443 = vld [vmem:[%s439 + $0xc] sm:$0xf]
    %v448 = vunpack.c.l.b16 %v440
    %v449 = vunpack.c.l.b16 %v441
    %v450 = vunpack.c.l.b16 %v442
    %v451 = vunpack.c.l.b16 %v443
    %v452 = vpack.c.b16 %v449, %v448
    %v453 = vpack.c.b16 %v451, %v450
    %456 = vmatprep.subr.bf16.mxu0 0
    %457 = vmatpush1.bf16.msra.mxu0 0
    %458 = vmatprep.subr.bf16.mxu0 0
    %459 = vmatpush1.bf16.msra.mxu0 0
    %460 = vmatprep.subr.bf16.mxu0 0
    %461 = vmatpush1.bf16.msra.mxu0 0
    %462 = vmatprep.subr.bf16.mxu0 0
    %463 = vmatpush1.bf16.msra.mxu0 0
    %464 = vmatprep.subr.bf16.mxu0 0
    %465 = vmatpush1.bf16.msra.mxu0 0
    %466 = vmatprep.subr.bf16.mxu0 0
    %467 = vmatpush1.bf16.msra.mxu0 0
    %468 = vmatprep.subr.bf16.mxu0 0
    %469 = vmatpush1.bf16.msra.mxu0 %v453
    %470 = vmatprep.subr.bf16.mxu0 0
    %471 = vmatpush1.bf16.msra.mxu0 %v452
    %472 = vmatprep.subr.bf16.mxu0 0
    %473 = vmatpush2.bf16.msra.mxu0 0
    %474 = vmatprep.subr.bf16.mxu0 0
    %475 = vmatpush2.bf16.msra.mxu0 0
    %476 = vmatprep.subr.bf16.mxu0 0
    %477 = vmatpush2.bf16.msra.mxu0 0
    %478 = vmatprep.subr.bf16.mxu0 0
    %479 = vmatpush2.bf16.msra.mxu0 0
    %480 = vmatprep.subr.bf16.mxu0 0
    %481 = vmatpush2.bf16.msra.mxu0 0
    %482 = vmatprep.subr.bf16.mxu0 0
    %483 = vmatpush2.bf16.msra.mxu0 0
    %484 = vmatprep.subr.bf16.mxu0 0
    %485 = vmatpush2.bf16.msra.mxu0 0
    %486 = vmatprep.subr.bf16.mxu0 0
    %487 = vmatpush2.bf16.msra.mxu0 0
    %488 = vmatprep.mubr.bf16.mxu0 0
    %489 = vmatmul.mubr.bf16.gmra.mxu0 %v83
    %v490 = vpop.f32.mrf.mxu0
    %v491 = vadd.f32 0.0, %v490
    %v492 = vpop.f32.mrf.mxu0
    %v493 = vpop.f32.mrf.mxu0
    %v494 = vpop.f32.mrf.mxu0
    %495 = vdwg.mxu0
    %v500 = vunpack.c.l.b16 %v435
    %v501 = vunpack.c.l.b16 %v436
    %v502 = vunpack.c.l.b16 %v437
    %v503 = vunpack.c.l.b16 %v438
    %v504 = vpack.c.b16 %v501, %v500
    %v505 = vpack.c.b16 %v503, %v502
    %508 = vmatprep.subr.bf16.mxu0 0
    %509 = vmatpush1.bf16.msra.mxu0 0
    %510 = vmatprep.subr.bf16.mxu0 0
    %511 = vmatpush1.bf16.msra.mxu0 0
    %512 = vmatprep.subr.bf16.mxu0 0
    %513 = vmatpush1.bf16.msra.mxu0 0
    %514 = vmatprep.subr.bf16.mxu0 0
    %515 = vmatpush1.bf16.msra.mxu0 0
    %516 = vmatprep.subr.bf16.mxu0 0
    %517 = vmatpush1.bf16.msra.mxu0 0
    %518 = vmatprep.subr.bf16.mxu0 0
    %519 = vmatpush1.bf16.msra.mxu0 0
    %520 = vmatprep.subr.bf16.mxu0 0
    %521 = vmatpush1.bf16.msra.mxu0 %v505
    %522 = vmatprep.subr.bf16.mxu0 0
    %523 = vmatpush1.bf16.msra.mxu0 %v504
    %524 = vmatprep.subr.bf16.mxu0 0
    %525 = vmatpush2.bf16.msra.mxu0 0
    %526 = vmatprep.subr.bf16.mxu0 0
    %527 = vmatpush2.bf16.msra.mxu0 0
    %528 = vmatprep.subr.bf16.mxu0 0
    %529 = vmatpush2.bf16.msra.mxu0 0
    %530 = vmatprep.subr.bf16.mxu0 0
    %531 = vmatpush2.bf16.msra.mxu0 0
    %532 = vmatprep.subr.bf16.mxu0 0
    %533 = vmatpush2.bf16.msra.mxu0 0
    %534 = vmatprep.subr.bf16.mxu0 0
    %535 = vmatpush2.bf16.msra.mxu0 0
    %536 = vmatprep.subr.bf16.mxu0 0
    %537 = vmatpush2.bf16.msra.mxu0 0
    %538 = vmatprep.subr.bf16.mxu0 0
    %539 = vmatpush2.bf16.msra.mxu0 0
    %540 = vmatprep.mubr.bf16.mxu0 0
    %541 = vmatmul.mubr.bf16.gmra.mxu0 %v138
    %v542 = vpop.f32.mrf.mxu0
    %v543 = vadd.f32 %v491, %v542
    %v544 = vpop.f32.mrf.mxu0
    %v545 = vpop.f32.mrf.mxu0
    %v546 = vpop.f32.mrf.mxu0
    %547 = vdwg.mxu0
    %s548 = scalar_lea.vmem %s5, 3
    %v549 = vld [vmem:[%s548] sm:$0x1]
    %v551 = vlaneseq
    %v552 = vshrl.u32 %v551, 7
    %v553 = vsub.s32 0, %v552
    %v554 = vrot.slane %v549, %v553
    %v556 = vadd.f32 %v543, %v554
    %v557 = vxor.u32 %v187, 2147483648
    %v558 = vmul.f32 %v557, 1.442695
    %v559 = vpow.pop %v558
    %v560 = vadd.f32 %v559, 1.0
    %v561 = vrcp.pop %v560
    %v562 = vmul.f32 1.0, %v561
    %v563 = vxor.u32 %v310, 2147483648
    %v564 = vmul.f32 %v563, 1.442695
    %v565 = vpow.pop %v564
    %v566 = vadd.f32 %v565, 1.0
    %v567 = vrcp.pop %v566
    %v568 = vmul.f32 1.0, %v567
    %v569 = vtanh.pop %v433
    %v570 = vxor.u32 %v556, 2147483648
    %v571 = vmul.f32 %v570, 1.442695
    %v572 = vpow.pop %v571
    %v573 = vadd.f32 %v572, 1.0
    %v574 = vrcp.pop %v573
    %v575 = vmul.f32 1.0, %v574
    %v576 = vmul.f32 %v568, %v58
    %v577 = vmul.f32 %v562, %v569
    %v578 = vadd.f32 %v576, %v577
    %v579 = vtanh.pop %v578
    %v580 = vmul.f32 %v575, %v579
    %v581 = vadd.f32 %v580, %v56
    %s582 = scalar_lea.vmem %s1, 8
    %v583 = vld [vmem:[%s582] sm:$0xff]
    %s584 = scalar_lea.vmem %s2, 8
    %v585 = vld [vmem:[%s584] sm:$0xff]
    %v586 = vpack.c.bf16 %v581, %v581
    %v587 = vpack.c.bf16 %v583, %v583
    %s588 = scalar_lea.vmem [#allocation2], 64
    %v589 = vld [vmem:[%s588] sm:$0xf]
    %v590 = vld [vmem:[%s588 + $0x4] sm:$0xf]
    %v591 = vld [vmem:[%s588 + $0x8] sm:$0xf]
    %v592 = vld [vmem:[%s588 + $0xc] sm:$0xf]
    %s593 = scalar_lea.vmem [#allocation5], 64
    %v594 = vld [vmem:[%s593] sm:$0xf]
    %v595 = vld [vmem:[%s593 + $0x4] sm:$0xf]
    %v596 = vld [vmem:[%s593 + $0x8] sm:$0xf]
    %v597 = vld [vmem:[%s593 + $0xc] sm:$0xf]
    %v602 = vunpack.c.l.b16 %v594
    %v603 = vunpack.c.l.b16 %v595
    %v604 = vunpack.c.l.b16 %v596
    %v605 = vunpack.c.l.b16 %v597
    %v606 = vpack.c.b16 %v603, %v602
    %v607 = vpack.c.b16 %v605, %v604
    %v611 = vsel %vm81, %v587, 0
    %613 = vmatprep.subr.bf16.mxu0 0
    %614 = vmatpush1.bf16.msra.mxu0 0
    %615 = vmatprep.subr.bf16.mxu0 0
    %616 = vmatpush1.bf16.msra.mxu0 0
    %617 = vmatprep.subr.bf16.mxu0 0
    %618 = vmatpush1.bf16.msra.mxu0 0
    %619 = vmatprep.subr.bf16.mxu0 0
    %620 = vmatpush1.bf16.msra.mxu0 0
    %621 = vmatprep.subr.bf16.mxu0 0
    %622 = vmatpush1.bf16.msra.mxu0 0
    %623 = vmatprep.subr.bf16.mxu0 0
    %624 = vmatpush1.bf16.msra.mxu0 0
    %625 = vmatprep.subr.bf16.mxu0 0
    %626 = vmatpush1.bf16.msra.mxu0 %v607
    %627 = vmatprep.subr.bf16.mxu0 0
    %628 = vmatpush1.bf16.msra.mxu0 %v606
    %629 = vmatprep.subr.bf16.mxu0 0
    %630 = vmatpush2.bf16.msra.mxu0 0
    %631 = vmatprep.subr.bf16.mxu0 0
    %632 = vmatpush2.bf16.msra.mxu0 0
    %633 = vmatprep.subr.bf16.mxu0 0
    %634 = vmatpush2.bf16.msra.mxu0 0
    %635 = vmatprep.subr.bf16.mxu0 0
    %636 = vmatpush2.bf16.msra.mxu0 0
    %637 = vmatprep.subr.bf16.mxu0 0
    %638 = vmatpush2.bf16.msra.mxu0 0
    %639 = vmatprep.subr.bf16.mxu0 0
    %640 = vmatpush2.bf16.msra.mxu0 0
    %641 = vmatprep.subr.bf16.mxu0 0
    %642 = vmatpush2.bf16.msra.mxu0 0
    %643 = vmatprep.subr.bf16.mxu0 0
    %644 = vmatpush2.bf16.msra.mxu0 0
    %645 = vmatprep.mubr.bf16.mxu0 0
    %646 = vmatmul.mubr.bf16.gmra.mxu0 %v611
    %v647 = vpop.f32.mrf.mxu0
    %v648 = vadd.f32 0.0, %v647
    %v649 = vpop.f32.mrf.mxu0
    %v650 = vpop.f32.mrf.mxu0
    %v651 = vpop.f32.mrf.mxu0
    %652 = vdwg.mxu0
    %v657 = vunpack.c.l.b16 %v589
    %v658 = vunpack.c.l.b16 %v590
    %v659 = vunpack.c.l.b16 %v591
    %v660 = vunpack.c.l.b16 %v592
    %v661 = vpack.c.b16 %v658, %v657
    %v662 = vpack.c.b16 %v660, %v659
    %v666 = vsel %vm81, %v586, 0
    %668 = vmatprep.subr.bf16.mxu0 0
    %669 = vmatpush1.bf16.msra.mxu0 0
    %670 = vmatprep.subr.bf16.mxu0 0
    %671 = vmatpush1.bf16.msra.mxu0 0
    %672 = vmatprep.subr.bf16.mxu0 0
    %673 = vmatpush1.bf16.msra.mxu0 0
    %674 = vmatprep.subr.bf16.mxu0 0
    %675 = vmatpush1.bf16.msra.mxu0 0
    %676 = vmatprep.subr.bf16.mxu0 0
    %677 = vmatpush1.bf16.msra.mxu0 0
    %678 = vmatprep.subr.bf16.mxu0 0
    %679 = vmatpush1.bf16.msra.mxu0 0
    %680 = vmatprep.subr.bf16.mxu0 0
    %681 = vmatpush1.bf16.msra.mxu0 %v662
    %682 = vmatprep.subr.bf16.mxu0 0
    %683 = vmatpush1.bf16.msra.mxu0 %v661
    %684 = vmatprep.subr.bf16.mxu0 0
    %685 = vmatpush2.bf16.msra.mxu0 0
    %686 = vmatprep.subr.bf16.mxu0 0
    %687 = vmatpush2.bf16.msra.mxu0 0
    %688 = vmatprep.subr.bf16.mxu0 0
    %689 = vmatpush2.bf16.msra.mxu0 0
    %690 = vmatprep.subr.bf16.mxu0 0
    %691 = vmatpush2.bf16.msra.mxu0 0
    %692 = vmatprep.subr.bf16.mxu0 0
    %693 = vmatpush2.bf16.msra.mxu0 0
    %694 = vmatprep.subr.bf16.mxu0 0
    %695 = vmatpush2.bf16.msra.mxu0 0
    %696 = vmatprep.subr.bf16.mxu0 0
    %697 = vmatpush2.bf16.msra.mxu0 0
    %698 = vmatprep.subr.bf16.mxu0 0
    %699 = vmatpush2.bf16.msra.mxu0 0
    %700 = vmatprep.mubr.bf16.mxu0 0
    %701 = vmatmul.mubr.bf16.gmra.mxu0 %v666
    %v702 = vpop.f32.mrf.mxu0
    %v703 = vadd.f32 %v648, %v702
    %v704 = vpop.f32.mrf.mxu0
    %v705 = vpop.f32.mrf.mxu0
    %v706 = vpop.f32.mrf.mxu0
    %707 = vdwg.mxu0
    %s708 = scalar_lea.vmem %s5, 4
    %v709 = vld [vmem:[%s708] sm:$0x1]
    %v711 = vlaneseq
    %v712 = vshrl.u32 %v711, 7
    %v713 = vsub.s32 0, %v712
    %v714 = vrot.slane %v709, %v713
    %v716 = vadd.f32 %v703, %v714
    %s717 = scalar_lea.vmem [#allocation2], 80
    %v718 = vld [vmem:[%s717] sm:$0xf]
    %v719 = vld [vmem:[%s717 + $0x4] sm:$0xf]
    %v720 = vld [vmem:[%s717 + $0x8] sm:$0xf]
    %v721 = vld [vmem:[%s717 + $0xc] sm:$0xf]
    %s722 = scalar_lea.vmem [#allocation5], 80
    %v723 = vld [vmem:[%s722] sm:$0xf]
    %v724 = vld [vmem:[%s722 + $0x4] sm:$0xf]
    %v725 = vld [vmem:[%s722 + $0x8] sm:$0xf]
    %v726 = vld [vmem:[%s722 + $0xc] sm:$0xf]
    %v731 = vunpack.c.l.b16 %v723
    %v732 = vunpack.c.l.b16 %v724
    %v733 = vunpack.c.l.b16 %v725
    %v734 = vunpack.c.l.b16 %v726
    %v735 = vpack.c.b16 %v732, %v731
    %v736 = vpack.c.b16 %v734, %v733
    %739 = vmatprep.subr.bf16.mxu0 0
    %740 = vmatpush1.bf16.msra.mxu0 0
    %741 = vmatprep.subr.bf16.mxu0 0
    %742 = vmatpush1.bf16.msra.mxu0 0
    %743 = vmatprep.subr.bf16.mxu0 0
    %744 = vmatpush1.bf16.msra.mxu0 0
    %745 = vmatprep.subr.bf16.mxu0 0
    %746 = vmatpush1.bf16.msra.mxu0 0
    %747 = vmatprep.subr.bf16.mxu0 0
    %748 = vmatpush1.bf16.msra.mxu0 0
    %749 = vmatprep.subr.bf16.mxu0 0
    %750 = vmatpush1.bf16.msra.mxu0 0
    %751 = vmatprep.subr.bf16.mxu0 0
    %752 = vmatpush1.bf16.msra.mxu0 %v736
    %753 = vmatprep.subr.bf16.mxu0 0
    %754 = vmatpush1.bf16.msra.mxu0 %v735
    %755 = vmatprep.subr.bf16.mxu0 0
    %756 = vmatpush2.bf16.msra.mxu0 0
    %757 = vmatprep.subr.bf16.mxu0 0
    %758 = vmatpush2.bf16.msra.mxu0 0
    %759 = vmatprep.subr.bf16.mxu0 0
    %760 = vmatpush2.bf16.msra.mxu0 0
    %761 = vmatprep.subr.bf16.mxu0 0
    %762 = vmatpush2.bf16.msra.mxu0 0
    %763 = vmatprep.subr.bf16.mxu0 0
    %764 = vmatpush2.bf16.msra.mxu0 0
    %765 = vmatprep.subr.bf16.mxu0 0
    %766 = vmatpush2.bf16.msra.mxu0 0
    %767 = vmatprep.subr.bf16.mxu0 0
    %768 = vmatpush2.bf16.msra.mxu0 0
    %769 = vmatprep.subr.bf16.mxu0 0
    %770 = vmatpush2.bf16.msra.mxu0 0
    %771 = vmatprep.mubr.bf16.mxu0 0
    %772 = vmatmul.mubr.bf16.gmra.mxu0 %v611
    %v773 = vpop.f32.mrf.mxu0
    %v774 = vadd.f32 0.0, %v773
    %v775 = vpop.f32.mrf.mxu0
    %v776 = vpop.f32.mrf.mxu0
    %v777 = vpop.f32.mrf.mxu0
    %778 = vdwg.mxu0
    %v783 = vunpack.c.l.b16 %v718
    %v784 = vunpack.c.l.b16 %v719
    %v785 = vunpack.c.l.b16 %v720
    %v786 = vunpack.c.l.b16 %v721
    %v787 = vpack.c.b16 %v784, %v783
    %v788 = vpack.c.b16 %v786, %v785
    %791 = vmatprep.subr.bf16.mxu0 0
    %792 = vmatpush1.bf16.msra.mxu0 0
    %793 = vmatprep.subr.bf16.mxu0 0
    %794 = vmatpush1.bf16.msra.mxu0 0
    %795 = vmatprep.subr.bf16.mxu0 0
    %796 = vmatpush1.bf16.msra.mxu0 0
    %797 = vmatprep.subr.bf16.mxu0 0
    %798 = vmatpush1.bf16.msra.mxu0 0
    %799 = vmatprep.subr.bf16.mxu0 0
    %800 = vmatpush1.bf16.msra.mxu0 0
    %801 = vmatprep.subr.bf16.mxu0 0
    %802 = vmatpush1.bf16.msra.mxu0 0
    %803 = vmatprep.subr.bf16.mxu0 0
    %804 = vmatpush1.bf16.msra.mxu0 %v788
    %805 = vmatprep.subr.bf16.mxu0 0
    %806 = vmatpush1.bf16.msra.mxu0 %v787
    %807 = vmatprep.subr.bf16.mxu0 0
    %808 = vmatpush2.bf16.msra.mxu0 0
    %809 = vmatprep.subr.bf16.mxu0 0
    %810 = vmatpush2.bf16.msra.mxu0 0
    %811 = vmatprep.subr.bf16.mxu0 0
    %812 = vmatpush2.bf16.msra.mxu0 0
    %813 = vmatprep.subr.bf16.mxu0 0
    %814 = vmatpush2.bf16.msra.mxu0 0
    %815 = vmatprep.subr.bf16.mxu0 0
    %816 = vmatpush2.bf16.msra.mxu0 0
    %817 = vmatprep.subr.bf16.mxu0 0
    %818 = vmatpush2.bf16.msra.mxu0 0
    %819 = vmatprep.subr.bf16.mxu0 0
    %820 = vmatpush2.bf16.msra.mxu0 0
    %821 = vmatprep.subr.bf16.mxu0 0
    %822 = vmatpush2.bf16.msra.mxu0 0
    %823 = vmatprep.mubr.bf16.mxu0 0
    %824 = vmatmul.mubr.bf16.gmra.mxu0 %v666
    %v825 = vpop.f32.mrf.mxu0
    %v826 = vadd.f32 %v774, %v825
    %v827 = vpop.f32.mrf.mxu0
    %v828 = vpop.f32.mrf.mxu0
    %v829 = vpop.f32.mrf.mxu0
    %830 = vdwg.mxu0
    %s831 = scalar_lea.vmem %s5, 5
    %v832 = vld [vmem:[%s831] sm:$0x1]
    %v834 = vlaneseq
    %v835 = vshrl.u32 %v834, 7
    %v836 = vsub.s32 0, %v835
    %v837 = vrot.slane %v832, %v836
    %v839 = vadd.f32 %v826, %v837
    %s840 = scalar_lea.vmem [#allocation2], 96
    %v841 = vld [vmem:[%s840] sm:$0xf]
    %v842 = vld [vmem:[%s840 + $0x4] sm:$0xf]
    %v843 = vld [vmem:[%s840 + $0x8] sm:$0xf]
    %v844 = vld [vmem:[%s840 + $0xc] sm:$0xf]
    %s845 = scalar_lea.vmem [#allocation5], 96
    %v846 = vld [vmem:[%s845] sm:$0xf]
    %v847 = vld [vmem:[%s845 + $0x4] sm:$0xf]
    %v848 = vld [vmem:[%s845 + $0x8] sm:$0xf]
    %v849 = vld [vmem:[%s845 + $0xc] sm:$0xf]
    %v854 = vunpack.c.l.b16 %v846
    %v855 = vunpack.c.l.b16 %v847
    %v856 = vunpack.c.l.b16 %v848
    %v857 = vunpack.c.l.b16 %v849
    %v858 = vpack.c.b16 %v855, %v854
    %v859 = vpack.c.b16 %v857, %v856
    %862 = vmatprep.subr.bf16.mxu0 0
    %863 = vmatpush1.bf16.msra.mxu0 0
    %864 = vmatprep.subr.bf16.mxu0 0
    %865 = vmatpush1.bf16.msra.mxu0 0
    %866 = vmatprep.subr.bf16.mxu0 0
    %867 = vmatpush1.bf16.msra.mxu0 0
    %868 = vmatprep.subr.bf16.mxu0 0
    %869 = vmatpush1.bf16.msra.mxu0 0
    %870 = vmatprep.subr.bf16.mxu0 0
    %871 = vmatpush1.bf16.msra.mxu0 0
    %872 = vmatprep.subr.bf16.mxu0 0
    %873 = vmatpush1.bf16.msra.mxu0 0
    %874 = vmatprep.subr.bf16.mxu0 0
    %875 = vmatpush1.bf16.msra.mxu0 %v859
    %876 = vmatprep.subr.bf16.mxu0 0
    %877 = vmatpush1.bf16.msra.mxu0 %v858
    %878 = vmatprep.subr.bf16.mxu0 0
    %879 = vmatpush2.bf16.msra.mxu0 0
    %880 = vmatprep.subr.bf16.mxu0 0
    %881 = vmatpush2.bf16.msra.mxu0 0
    %882 = vmatprep.subr.bf16.mxu0 0
    %883 = vmatpush2.bf16.msra.mxu0 0
    %884 = vmatprep.subr.bf16.mxu0 0
    %885 = vmatpush2.bf16.msra.mxu0 0
    %886 = vmatprep.subr.bf16.mxu0 0
    %887 = vmatpush2.bf16.msra.mxu0 0
    %888 = vmatprep.subr.bf16.mxu0 0
    %889 = vmatpush2.bf16.msra.mxu0 0
    %890 = vmatprep.subr.bf16.mxu0 0
    %891 = vmatpush2.bf16.msra.mxu0 0
    %892 = vmatprep.subr.bf16.mxu0 0
    %893 = vmatpush2.bf16.msra.mxu0 0
    %894 = vmatprep.mubr.bf16.mxu0 0
    %895 = vmatmul.mubr.bf16.gmra.mxu0 %v611
    %v896 = vpop.f32.mrf.mxu0
    %v897 = vadd.f32 0.0, %v896
    %v898 = vpop.f32.mrf.mxu0
    %v899 = vpop.f32.mrf.mxu0
    %v900 = vpop.f32.mrf.mxu0
    %901 = vdwg.mxu0
    %v906 = vunpack.c.l.b16 %v841
    %v907 = vunpack.c.l.b16 %v842
    %v908 = vunpack.c.l.b16 %v843
    %v909 = vunpack.c.l.b16 %v844
    %v910 = vpack.c.b16 %v907, %v906
    %v911 = vpack.c.b16 %v909, %v908
    %914 = vmatprep.subr.bf16.mxu0 0
    %915 = vmatpush1.bf16.msra.mxu0 0
    %916 = vmatprep.subr.bf16.mxu0 0
    %917 = vmatpush1.bf16.msra.mxu0 0
    %918 = vmatprep.subr.bf16.mxu0 0
    %919 = vmatpush1.bf16.msra.mxu0 0
    %920 = vmatprep.subr.bf16.mxu0 0
    %921 = vmatpush1.bf16.msra.mxu0 0
    %922 = vmatprep.subr.bf16.mxu0 0
    %923 = vmatpush1.bf16.msra.mxu0 0
    %924 = vmatprep.subr.bf16.mxu0 0
    %925 = vmatpush1.bf16.msra.mxu0 0
    %926 = vmatprep.subr.bf16.mxu0 0
    %927 = vmatpush1.bf16.msra.mxu0 %v911
    %928 = vmatprep.subr.bf16.mxu0 0
    %929 = vmatpush1.bf16.msra.mxu0 %v910
    %930 = vmatprep.subr.bf16.mxu0 0
    %931 = vmatpush2.bf16.msra.mxu0 0
    %932 = vmatprep.subr.bf16.mxu0 0
    %933 = vmatpush2.bf16.msra.mxu0 0
    %934 = vmatprep.subr.bf16.mxu0 0
    %935 = vmatpush2.bf16.msra.mxu0 0
    %936 = vmatprep.subr.bf16.mxu0 0
    %937 = vmatpush2.bf16.msra.mxu0 0
    %938 = vmatprep.subr.bf16.mxu0 0
    %939 = vmatpush2.bf16.msra.mxu0 0
    %940 = vmatprep.subr.bf16.mxu0 0
    %941 = vmatpush2.bf16.msra.mxu0 0
    %942 = vmatprep.subr.bf16.mxu0 0
    %943 = vmatpush2.bf16.msra.mxu0 0
    %944 = vmatprep.subr.bf16.mxu0 0
    %945 = vmatpush2.bf16.msra.mxu0 0
    %946 = vmatprep.mubr.bf16.mxu0 0
    %947 = vmatmul.mubr.bf16.gmra.mxu0 %v666
    %v948 = vpop.f32.mrf.mxu0
    %v949 = vadd.f32 %v897, %v948
    %v950 = vpop.f32.mrf.mxu0
    %v951 = vpop.f32.mrf.mxu0
    %v952 = vpop.f32.mrf.mxu0
    %953 = vdwg.mxu0
    %s954 = scalar_lea.vmem %s5, 6
    %v955 = vld [vmem:[%s954] sm:$0x1]
    %v957 = vlaneseq
    %v958 = vshrl.u32 %v957, 7
    %v959 = vsub.s32 0, %v958
    %v960 = vrot.slane %v955, %v959
    %v962 = vadd.f32 %v949, %v960
    %s963 = scalar_lea.vmem [#allocation2], 112
    %v964 = vld [vmem:[%s963] sm:$0xf]
    %v965 = vld [vmem:[%s963 + $0x4] sm:$0xf]
    %v966 = vld [vmem:[%s963 + $0x8] sm:$0xf]
    %v967 = vld [vmem:[%s963 + $0xc] sm:$0xf]
    %s968 = scalar_lea.vmem [#allocation5], 112
    %v969 = vld [vmem:[%s968] sm:$0xf]
    %v970 = vld [vmem:[%s968 + $0x4] sm:$0xf]
    %v971 = vld [vmem:[%s968 + $0x8] sm:$0xf]
    %v972 = vld [vmem:[%s968 + $0xc] sm:$0xf]
    %v977 = vunpack.c.l.b16 %v969
    %v978 = vunpack.c.l.b16 %v970
    %v979 = vunpack.c.l.b16 %v971
    %v980 = vunpack.c.l.b16 %v972
    %v981 = vpack.c.b16 %v978, %v977
    %v982 = vpack.c.b16 %v980, %v979
    %985 = vmatprep.subr.bf16.mxu0 0
    %986 = vmatpush1.bf16.msra.mxu0 0
    %987 = vmatprep.subr.bf16.mxu0 0
    %988 = vmatpush1.bf16.msra.mxu0 0
    %989 = vmatprep.subr.bf16.mxu0 0
    %990 = vmatpush1.bf16.msra.mxu0 0
    %991 = vmatprep.subr.bf16.mxu0 0
    %992 = vmatpush1.bf16.msra.mxu0 0
    %993 = vmatprep.subr.bf16.mxu0 0
    %994 = vmatpush1.bf16.msra.mxu0 0
    %995 = vmatprep.subr.bf16.mxu0 0
    %996 = vmatpush1.bf16.msra.mxu0 0
    %997 = vmatprep.subr.bf16.mxu0 0
    %998 = vmatpush1.bf16.msra.mxu0 %v982
    %999 = vmatprep.subr.bf16.mxu0 0
    %1000 = vmatpush1.bf16.msra.mxu0 %v981
    %1001 = vmatprep.subr.bf16.mxu0 0
    %1002 = vmatpush2.bf16.msra.mxu0 0
    %1003 = vmatprep.subr.bf16.mxu0 0
    %1004 = vmatpush2.bf16.msra.mxu0 0
    %1005 = vmatprep.subr.bf16.mxu0 0
    %1006 = vmatpush2.bf16.msra.mxu0 0
    %1007 = vmatprep.subr.bf16.mxu0 0
    %1008 = vmatpush2.bf16.msra.mxu0 0
    %1009 = vmatprep.subr.bf16.mxu0 0
    %1010 = vmatpush2.bf16.msra.mxu0 0
    %1011 = vmatprep.subr.bf16.mxu0 0
    %1012 = vmatpush2.bf16.msra.mxu0 0
    %1013 = vmatprep.subr.bf16.mxu0 0
    %1014 = vmatpush2.bf16.msra.mxu0 0
    %1015 = vmatprep.subr.bf16.mxu0 0
    %1016 = vmatpush2.bf16.msra.mxu0 0
    %1017 = vmatprep.mubr.bf16.mxu0 0
    %1018 = vmatmul.mubr.bf16.gmra.mxu0 %v611
    %v1019 = vpop.f32.mrf.mxu0
    %v1020 = vadd.f32 0.0, %v1019
    %v1021 = vpop.f32.mrf.mxu0
    %v1022 = vpop.f32.mrf.mxu0
    %v1023 = vpop.f32.mrf.mxu0
    %1024 = vdwg.mxu0
    %v1029 = vunpack.c.l.b16 %v964
    %v1030 = vunpack.c.l.b16 %v965
    %v1031 = vunpack.c.l.b16 %v966
    %v1032 = vunpack.c.l.b16 %v967
    %v1033 = vpack.c.b16 %v1030, %v1029
    %v1034 = vpack.c.b16 %v1032, %v1031
    %1037 = vmatprep.subr.bf16.mxu0 0
    %1038 = vmatpush1.bf16.msra.mxu0 0
    %1039 = vmatprep.subr.bf16.mxu0 0
    %1040 = vmatpush1.bf16.msra.mxu0 0
    %1041 = vmatprep.subr.bf16.mxu0 0
    %1042 = vmatpush1.bf16.msra.mxu0 0
    %1043 = vmatprep.subr.bf16.mxu0 0
    %1044 = vmatpush1.bf16.msra.mxu0 0
    %1045 = vmatprep.subr.bf16.mxu0 0
    %1046 = vmatpush1.bf16.msra.mxu0 0
    %1047 = vmatprep.subr.bf16.mxu0 0
    %1048 = vmatpush1.bf16.msra.mxu0 0
    %1049 = vmatprep.subr.bf16.mxu0 0
    %1050 = vmatpush1.bf16.msra.mxu0 %v1034
    %1051 = vmatprep.subr.bf16.mxu0 0
    %1052 = vmatpush1.bf16.msra.mxu0 %v1033
    %1053 = vmatprep.subr.bf16.mxu0 0
    %1054 = vmatpush2.bf16.msra.mxu0 0
    %1055 = vmatprep.subr.bf16.mxu0 0
    %1056 = vmatpush2.bf16.msra.mxu0 0
    %1057 = vmatprep.subr.bf16.mxu0 0
    %1058 = vmatpush2.bf16.msra.mxu0 0
    %1059 = vmatprep.subr.bf16.mxu0 0
    %1060 = vmatpush2.bf16.msra.mxu0 0
    %1061 = vmatprep.subr.bf16.mxu0 0
    %1062 = vmatpush2.bf16.msra.mxu0 0
    %1063 = vmatprep.subr.bf16.mxu0 0
    %1064 = vmatpush2.bf16.msra.mxu0 0
    %1065 = vmatprep.subr.bf16.mxu0 0
    %1066 = vmatpush2.bf16.msra.mxu0 0
    %1067 = vmatprep.subr.bf16.mxu0 0
    %1068 = vmatpush2.bf16.msra.mxu0 0
    %1069 = vmatprep.mubr.bf16.mxu0 0
    %1070 = vmatmul.mubr.bf16.gmra.mxu0 %v666
    %v1071 = vpop.f32.mrf.mxu0
    %v1072 = vadd.f32 %v1020, %v1071
    %v1073 = vpop.f32.mrf.mxu0
    %v1074 = vpop.f32.mrf.mxu0
    %v1075 = vpop.f32.mrf.mxu0
    %1076 = vdwg.mxu0
    %s1077 = scalar_lea.vmem %s5, 7
    %v1078 = vld [vmem:[%s1077] sm:$0x1]
    %v1080 = vlaneseq
    %v1081 = vshrl.u32 %v1080, 7
    %v1082 = vsub.s32 0, %v1081
    %v1083 = vrot.slane %v1078, %v1082
    %v1085 = vadd.f32 %v1072, %v1083
    %v1086 = vxor.u32 %v716, 2147483648
    %v1087 = vmul.f32 %v1086, 1.442695
    %v1088 = vpow.pop %v1087
    %v1089 = vadd.f32 %v1088, 1.0
    %v1090 = vrcp.pop %v1089
    %v1091 = vmul.f32 1.0, %v1090
    %v1092 = vxor.u32 %v839, 2147483648
    %v1093 = vmul.f32 %v1092, 1.442695
    %v1094 = vpow.pop %v1093
    %v1095 = vadd.f32 %v1094, 1.0
    %v1096 = vrcp.pop %v1095
    %v1097 = vmul.f32 1.0, %v1096
    %v1098 = vtanh.pop %v962
    %v1099 = vxor.u32 %v1085, 2147483648
    %v1100 = vmul.f32 %v1099, 1.442695
    %v1101 = vpow.pop %v1100
    %v1102 = vadd.f32 %v1101, 1.0
    %v1103 = vrcp.pop %v1102
    %v1104 = vmul.f32 1.0, %v1103
    %v1105 = vmul.f32 %v1097, %v585
    %v1106 = vmul.f32 %v1091, %v1098
    %v1107 = vadd.f32 %v1105, %v1106
    %v1108 = vtanh.pop %v1107
    %v1109 = vmul.f32 %v1104, %v1108
    %1110 = vst.msk [vmem:[#allocation7] sm:$0xff] %vm81, %v1109
    %1111 = vst.msk [vmem:[#allocation8] sm:$0xff] %vm81, %v1107
    // Predicated region
    $region34: #{skip_lstm_forward.1} parent=1 // pred_check
      _
    $region35: #{skip_lstm_forward.1} parent=1 // pred_check_branch
      %1113 = sbr.rel (0) target = $region37
    $region36: #{skip_lstm_forward.1} parent=1 // pred_region
      %s1115 = ssub.s32 128, 128
      %1116 = vsyncadd [#allocation4], %s1115
      %s1118 = sshll.u32 [#allocation7], 4
      %s1119 = int_to_ptr.vmem [resolvable:$true] %s1118
      %1121 = dma.vmem_to_hbm [thread:$0]  %s1119, 128, %s6, [#allocation4]
    $region37: #{skip_lstm_forward.1} parent=1 // pred_fallthru
      _
    // Predicated region
    $region38: #{skip_lstm_forward.1} parent=1 // pred_check
      _
    $region39: #{skip_lstm_forward.1} parent=1 // pred_check_branch
      %1123 = sbr.rel (0) target = $region41
    $region40: #{skip_lstm_forward.1} parent=1 // pred_region
      %s1125 = ssub.s32 128, 128
      %1126 = vsyncadd [#allocation9], %s1125
      %s1128 = sshll.u32 [#allocation8], 4
      %s1129 = int_to_ptr.vmem [resolvable:$true] %s1128
      %1131 = dma.vmem_to_hbm [thread:$0]  %s1129, 128, %s7, [#allocation9]
    $region41: #{skip_lstm_forward.1} parent=1 // pred_fallthru
      _
    // Predicated region
    $region42: #{skip_lstm_forward.1} parent=1 // pred_check
      _
    $region43: #{skip_lstm_forward.1} parent=1 // pred_check_branch
      %1133 = sbr.rel (0) target = $region45
    $region44: #{skip_lstm_forward.1} parent=1 // pred_region
      %1134 = dma.done [#allocation4], 128
    $region45: #{skip_lstm_forward.1} parent=1 // pred_fallthru
      _
    // Predicated region
    $region46: #{skip_lstm_forward.1} parent=1 // pred_check
      _
    $region47: #{skip_lstm_forward.1} parent=1 // pred_check_branch
      %1136 = sbr.rel (0) target = $region49
    $region48: #{skip_lstm_forward.1} parent=1 // pred_region
      %1137 = dma.done [#allocation9], 128
    $region49: #{skip_lstm_forward.1} parent=1 // pred_fallthru
      _
    %1138 = vsyncpa [#allocation3], 1
    %1139 = vsyncpa [#allocation6], 1
    %1140 = vsyncpa [#allocation4], 1
    %1141 = vsyncpa [#allocation9], 1

</llo_original>
